<compile_context>
chip_gen: v6e
topology: v6e:2x2x1
jax: 0.10.0
libtpu: 0.0.40
codegen_flags: <defaults>
</compile_context>

<pallas_src>
import jax
import jax.numpy as jnp
from jax.experimental import pallas as pl
from jax.experimental.pallas import tpu as pltpu

C = 32          # channels (the module fixes out_channels=32 everywhere)
EPS = 1e-5      # BatchNorm1d default eps


def _make_kernel(N, L):
    M = N * L

    def kernel(x_ref, w0_ref, wres_ref, bias_ref, gamma_ref, beta_ref,
               out_ref, hbuf_ref, pbuf_ref):
        inv_m = 1.0 / float(M)
        ones_row = jnp.ones((1, M), jnp.float32)   # hoisted; reused by every BN

        def bn(h2d, i):
            # Single-pass batch stats; row reductions done on the MXU (ones-vector matmul).
            s1 = jnp.dot(ones_row, h2d, preferred_element_type=jnp.float32)        # (1, C)
            s2 = jnp.dot(ones_row, h2d * h2d, preferred_element_type=jnp.float32)  # (1, C)
            mean = s1 * inv_m
            var = jnp.maximum(s2 * inv_m - mean * mean, 0.0)
            scale = gamma_ref[i:i + 1, :] * jax.lax.rsqrt(var + EPS)
            shift = beta_ref[i:i + 1, :] - mean * scale
            return h2d * scale + shift
            # TODO(synk): running-mean/var buffers are not updated (train-mode forward only).

        def conv5(h2d, u, bias_idx):
            # Conv1d(k=5, padding=2) via the zero-halo scratch + one K=160 im2col matmul.
            hbuf_ref[:, 2:2 + L, :] = h2d.reshape(N, L, C)
            cols = [hbuf_ref[:, k:k + L, :].reshape(M, C) for k in range(5)]
            im2col = jnp.concatenate(cols, axis=1)                       # (M, 5*C)
            y = jnp.dot(im2col, wres_ref[u], preferred_element_type=jnp.float32)
            return y + bias_ref[bias_idx:bias_idx + 1, :]                # bias NOT cancelled (ReLU before BN)

        # Zero the halo rows once; they are never written again, so they stay zero.
        zero_halo = jnp.zeros((N, 2, C), jnp.float32)
        hbuf_ref[:, 0:2, :] = zero_halo
        hbuf_ref[:, L + 2:L + 4, :] = zero_halo

        x = x_ref[...]                                                   # (M, C)

        # --- Residual_Stack.conv1 (kernel_size=1) + batch_norm ---
        # conv1 bias omitted: immediately followed by train-mode BN (no ReLU), so it is
        # exactly cancelled by the batch-mean subtraction.
        h = jnp.dot(x, w0_ref[...], preferred_element_type=jnp.float32)
        h = bn(h, 0)

        # --- residual_unit_1 and residual_unit_2: conv -> ReLU -> BN, twice, plus skip ---
        for u, b1, b2 in ((0, 1, 2), (2, 3, 4)):
            res = h
            h = bn(jnp.maximum(conv5(h, u, b1), 0.0), b1)
            h = bn(jnp.maximum(conv5(h, u + 1, b2), 0.0), b2)
            h = h + res

        # --- MaxPool1d(2), in-kernel ---
        # Stride-2 even/odd row reads (rows = (batch, position), L even => pooled pairs
        # never cross a batch boundary), then a half-size max.  Single M*C write, two
        # (M/2)*C reads; no halo buffer or full-size pairwise max needed.
        pbuf_ref[...] = h
        even = pbuf_ref[pl.ds(0, M // 2, 2), :]                          # positions 0,2,4,...
        odd = pbuf_ref[pl.ds(1, M // 2, 2), :]                           # positions 1,3,5,...
        out_ref[...] = jnp.maximum(even, odd)

    return kernel


def residual_stack_forward(x_ncl, w0, wres, biases, gammas, betas):
    """x_ncl: (N, 32, L) f32 -> (N, 32, L//2) f32 (PyTorch NCL, train-mode BatchNorm)."""
    N, Cin, L = x_ncl.shape
    assert Cin == C
    assert L % 8 == 0, "kernel assumes L is a multiple of 8 (sublane alignment)"
    M = N * L

    # Whole-array-in-VMEM design; rough budget guard.
    # TODO(synk): M-tile the grid with cross-tile BN partial-sum accumulation (and mark the
    # tile axis "parallel" to use both v7x TensorCores) once shapes outgrow this budget.
    approx_vmem_bytes = 16 * M * C * 4
    assert approx_vmem_bytes < 44 * 1024 * 1024, "input too large for the untiled kernel"

    # NCL -> (N*L, C) channels-last rows.
    # TODO(synk): fold this transpose (and a lane-dense 4-positions-per-row repack to 128
    # lanes) into the kernel I/O to remove the extra HBM passes around the call.
    x_mc = jnp.transpose(x_ncl, (0, 2, 1)).reshape(M, C).astype(jnp.float32)
    wcat = wres.astype(jnp.float32).reshape(4, 5 * C, C)   # per-tap (K,Ci,Co) -> im2col (5*Ci, Co)

    out_mc = pl.pallas_call(
        _make_kernel(N, L),
        out_shape=jax.ShapeDtypeStruct((M // 2, C), jnp.float32),
        in_specs=[pl.BlockSpec(memory_space=pltpu.MemorySpace.VMEM)] * 6,
        out_specs=pl.BlockSpec(memory_space=pltpu.MemorySpace.VMEM),
        scratch_shapes=[pltpu.VMEM((N, L + 4, C), jnp.float32),   # halo-padded activation buffer
                        pltpu.VMEM((M, C), jnp.float32)],         # pre-pool buffer (stride-2 reads)
        compiler_params=pltpu.CompilerParams(vmem_limit_bytes=48 * 1024 * 1024),
    )(x_mc, w0.astype(jnp.float32), wcat, biases.astype(jnp.float32),
      gammas.astype(jnp.float32), betas.astype(jnp.float32))

    return out_mc.reshape(N, L // 2, C).transpose(0, 2, 1)       # back to NCL


# ------------------------- pure-JAX reference (PyTorch semantics) -------------------------
def _conv1d_ref(x_ncl, w_oik, b, pad):
    y = jax.lax.conv_general_dilated(
        x_ncl, w_oik, window_strides=(1,), padding=[(pad, pad)],
        dimension_numbers=("NCH", "OIH", "NCH"))
    return y + b[None, :, None]


def _bn_ref(x_ncl, g, b):
    mean = jnp.mean(x_ncl, axis=(0, 2), keepdims=True)
    var = jnp.mean((x_ncl - mean) ** 2, axis=(0, 2), keepdims=True)
    return (x_ncl - mean) * jax.lax.rsqrt(var + EPS) * g[None, :, None] + b[None, :, None]


def reference_forward(x_ncl, w0, wres, biases, gammas, betas):
    # per-tap (K, Ci, Co) -> PyTorch (Co, Ci, K)
    def w_of(u):
        return jnp.transpose(wres[u], (2, 1, 0))

    h = _conv1d_ref(x_ncl, w0.T[:, :, None], biases[0], pad=0)   # reference keeps conv1 bias
    h = _bn_ref(h, gammas[0], betas[0])
    for u, (bi1, bi2) in zip((0, 2), ((1, 2), (3, 4))):
        res = h
        h = _conv1d_ref(h, w_of(u), biases[bi1], pad=2)
        h = jnp.maximum(h, 0.0)
        h = _bn_ref(h, gammas[bi1], betas[bi1])
        h = _conv1d_ref(h, w_of(u + 1), biases[bi2], pad=2)
        h = jnp.maximum(h, 0.0)
        h = _bn_ref(h, gammas[bi2], betas[bi2])
        h = h + res
    N, _, L = h.shape
    return h[:, :, : (L // 2) * 2].reshape(N, C, L // 2, 2).max(axis=-1)


if __name__ == "__main__":
    key = jax.random.PRNGKey(0)
    k0, k1, k2, k3, k4, k5 = jax.random.split(key, 6)

    N, L = 2, 16
    x = jax.random.normal(k0, (N, C, L), dtype=jnp.float32)

    # deterministic synthetic parameters (module shapes)
    w0 = jax.random.normal(k1, (C, C), dtype=jnp.float32) * 0.1            # conv1 (1x1), as (Ci, Co)
    wres = jax.random.normal(k2, (4, 5, C, C), dtype=jnp.float32) * 0.1    # 4 residual convs, per-tap (K, Ci, Co)
    biases = jax.random.normal(k3, (5, C), dtype=jnp.float32) * 0.05       # conv1 + 4 residual conv biases
    gammas = 1.0 + 0.1 * jax.random.normal(k4, (5, C), dtype=jnp.float32)  # BN weights
    betas = 0.1 * jax.random.normal(k5, (5, C), dtype=jnp.float32)         # BN biases

    out = jax.jit(residual_stack_forward)(x, w0, wres, biases, gammas, betas)
    out = jax.block_until_ready(out)

    ref = reference_forward(x, w0, wres, biases, gammas, betas)
    assert out.shape == (N, C, L // 2), out.shape
    max_err = float(jnp.max(jnp.abs(out - ref)))
    assert jnp.allclose(out, ref, atol=2e-3, rtol=2e-3), max_err

    print("KERNEL_OK")
</pallas_src>

<mosaic_0001>
module attributes {stable_mosaic.version = 11 : i64} {
  func.func @kernel(%arg0: memref<32x32xf32, #tpu.memory_space<vmem>>, %arg1: memref<32x32xf32, #tpu.memory_space<vmem>>, %arg2: memref<4x160x32xf32, #tpu.memory_space<vmem>>, %arg3: memref<5x32xf32, #tpu.memory_space<vmem>>, %arg4: memref<5x32xf32, #tpu.memory_space<vmem>>, %arg5: memref<5x32xf32, #tpu.memory_space<vmem>>, %arg6: memref<16x32xf32, #tpu.memory_space<vmem>>, %arg7: memref<2x20x32xf32, #tpu.memory_space<vmem>>, %arg8: memref<32x32xf32, #tpu.memory_space<vmem>>) attributes {dimension_semantics = [], scalar_prefetch = 0 : i64, scratch_operands = 2 : i64, tpu.core_type = #tpu.core_type<tc>} {
    %cst = arith.constant 1.000000e+00 : f32
    %0 = vector.broadcast %cst : f32 to vector<1x32xf32>
    %cst_0 = arith.constant 0.000000e+00 : f32
    %1 = vector.broadcast %cst_0 : f32 to vector<2x2x32xf32>
    %c0 = arith.constant 0 : index
    %c0_1 = arith.constant 0 : index
    %c0_2 = arith.constant 0 : index
    %2 = vector.load %arg7[%c0, %c0_1, %c0_2] : memref<2x20x32xf32, #tpu.memory_space<vmem>>, vector<2x2x32xf32>
    tpu.vector_store %arg7[%c0, %c0_1, %c0_2], %1 {strides = array<i32>} : memref<2x20x32xf32, #tpu.memory_space<vmem>>, vector<2x2x32xf32>,
    %c0_3 = arith.constant 0 : index
    %c18 = arith.constant 18 : index
    %c0_4 = arith.constant 0 : index
    %3 = vector.load %arg7[%c0_3, %c18, %c0_4] : memref<2x20x32xf32, #tpu.memory_space<vmem>>, vector<2x2x32xf32>
    tpu.vector_store %arg7[%c0_3, %c18, %c0_4], %1 {strides = array<i32>} : memref<2x20x32xf32, #tpu.memory_space<vmem>>, vector<2x2x32xf32>,
    %c0_5 = arith.constant 0 : index
    %c0_6 = arith.constant 0 : index
    %4 = vector.load %arg0[%c0_5, %c0_6] : memref<32x32xf32, #tpu.memory_space<vmem>>, vector<32x32xf32>
    %c0_7 = arith.constant 0 : index
    %c0_8 = arith.constant 0 : index
    %5 = vector.load %arg1[%c0_7, %c0_8] : memref<32x32xf32, #tpu.memory_space<vmem>>, vector<32x32xf32>
    %cst_9 = arith.constant dense<0.000000e+00> : vector<32x32xf32>
    %6 = tpu.matmul %4, %5, %cst_9 {dimension_numbers = #tpu.dot_dimension_numbers<[1], [0], [0], [1], [0, 0, 1, 1], [], []>} : vector<32x32xf32>, vector<32x32xf32>, vector<32x32xf32> -> vector<32x32xf32>
    %cst_10 = arith.constant dense<0.000000e+00> : vector<1x32xf32>
    %7 = tpu.matmul %0, %6, %cst_10 {dimension_numbers = #tpu.dot_dimension_numbers<[1], [0], [0], [1], [0, 0, 1, 1], [], []>} : vector<1x32xf32>, vector<32x32xf32>, vector<1x32xf32> -> vector<1x32xf32>
    %8 = arith.mulf %6, %6 : vector<32x32xf32>
    %cst_11 = arith.constant dense<0.000000e+00> : vector<1x32xf32>
    %9 = tpu.matmul %0, %8, %cst_11 {dimension_numbers = #tpu.dot_dimension_numbers<[1], [0], [0], [1], [0, 0, 1, 1], [], []>} : vector<1x32xf32>, vector<32x32xf32>, vector<1x32xf32> -> vector<1x32xf32>
    %cst_12 = arith.constant 3.125000e-02 : f32
    %10 = vector.broadcast %cst_12 : f32 to vector<1x32xf32>
    %11 = arith.mulf %7, %10 : vector<1x32xf32>
    %cst_13 = arith.constant 3.125000e-02 : f32
    %12 = vector.broadcast %cst_13 : f32 to vector<1x32xf32>
    %13 = arith.mulf %9, %12 : vector<1x32xf32>
    %14 = arith.mulf %11, %11 : vector<1x32xf32>
    %15 = arith.subf %13, %14 : vector<1x32xf32>
    %cst_14 = arith.constant 0.000000e+00 : f32
    %16 = vector.broadcast %cst_14 : f32 to vector<1x32xf32>
    %17 = arith.maximumf %15, %16 : vector<1x32xf32>
    %c0_15 = arith.constant 0 : index
    %c0_16 = arith.constant 0 : index
    %18 = vector.load %arg4[%c0_15, %c0_16] : memref<5x32xf32, #tpu.memory_space<vmem>>, vector<1x32xf32>
    %cst_17 = arith.constant 9.99999974E-6 : f32
    %19 = vector.broadcast %cst_17 : f32 to vector<1x32xf32>
    %20 = arith.addf %17, %19 : vector<1x32xf32>
    %21 = math.rsqrt %20 : vector<1x32xf32>
    %22 = arith.mulf %18, %21 : vector<1x32xf32>
    %c0_18 = arith.constant 0 : index
    %c0_19 = arith.constant 0 : index
    %23 = vector.load %arg5[%c0_18, %c0_19] : memref<5x32xf32, #tpu.memory_space<vmem>>, vector<1x32xf32>
    %24 = arith.mulf %11, %22 : vector<1x32xf32>
    %25 = arith.subf %23, %24 : vector<1x32xf32>
    %26 = vector.broadcast %22 : vector<1x32xf32> to vector<32x32xf32>
    %27 = arith.mulf %6, %26 : vector<32x32xf32>
    %28 = vector.broadcast %25 : vector<1x32xf32> to vector<32x32xf32>
    %29 = arith.addf %27, %28 : vector<32x32xf32>
    %30 = vector.shape_cast %29 : vector<32x32xf32> to vector<2x16x32xf32>
    %c0_20 = arith.constant 0 : index
    %c2 = arith.constant 2 : index
    %c0_21 = arith.constant 0 : index
    %31 = vector.load %arg7[%c0_20, %c2, %c0_21] : memref<2x20x32xf32, #tpu.memory_space<vmem>>, vector<2x16x32xf32>
    tpu.vector_store %arg7[%c0_20, %c2, %c0_21], %30 {strides = array<i32>} : memref<2x20x32xf32, #tpu.memory_space<vmem>>, vector<2x16x32xf32>,
    %c0_22 = arith.constant 0 : index
    %c0_23 = arith.constant 0 : index
    %c0_24 = arith.constant 0 : index
    %32 = vector.load %arg7[%c0_22, %c0_23, %c0_24] : memref<2x20x32xf32, #tpu.memory_space<vmem>>, vector<2x16x32xf32>
    %33 = vector.shape_cast %32 : vector<2x16x32xf32> to vector<32x32xf32>
    %c0_25 = arith.constant 0 : index
    %c1 = arith.constant 1 : index
    %c0_26 = arith.constant 0 : index
    %34 = vector.load %arg7[%c0_25, %c1, %c0_26] : memref<2x20x32xf32, #tpu.memory_space<vmem>>, vector<2x16x32xf32>
    %35 = vector.shape_cast %34 : vector<2x16x32xf32> to vector<32x32xf32>
    %c0_27 = arith.constant 0 : index
    %c2_28 = arith.constant 2 : index
    %c0_29 = arith.constant 0 : index
    %36 = vector.load %arg7[%c0_27, %c2_28, %c0_29] : memref<2x20x32xf32, #tpu.memory_space<vmem>>, vector<2x16x32xf32>
    %37 = vector.shape_cast %36 : vector<2x16x32xf32> to vector<32x32xf32>
    %c0_30 = arith.constant 0 : index
    %c3 = arith.constant 3 : index
    %c0_31 = arith.constant 0 : index
    %38 = vector.load %arg7[%c0_30, %c3, %c0_31] : memref<2x20x32xf32, #tpu.memory_space<vmem>>, vector<2x16x32xf32>
    %39 = vector.shape_cast %38 : vector<2x16x32xf32> to vector<32x32xf32>
    %c0_32 = arith.constant 0 : index
    %c4 = arith.constant 4 : index
    %c0_33 = arith.constant 0 : index
    %40 = vector.load %arg7[%c0_32, %c4, %c0_33] : memref<2x20x32xf32, #tpu.memory_space<vmem>>, vector<2x16x32xf32>
    %41 = vector.shape_cast %40 : vector<2x16x32xf32> to vector<32x32xf32>
    %42 = tpu.concatenate %33, %35, %37, %39, %41 in 1 : vector<32x32xf32>, vector<32x32xf32>, vector<32x32xf32>, vector<32x32xf32>, vector<32x32xf32> -> vector<32x160xf32>
    %c0_34 = arith.constant 0 : index
    %c0_35 = arith.constant 0 : index
    %c0_36 = arith.constant 0 : index
    %43 = vector.load %arg2[%c0_34, %c0_35, %c0_36] : memref<4x160x32xf32, #tpu.memory_space<vmem>>, vector<1x160x32xf32>
    %44 = vector.shape_cast %43 : vector<1x160x32xf32> to vector<160x32xf32>
    %cst_37 = arith.constant dense<0.000000e+00> : vector<32x32xf32>
    %45 = tpu.matmul %42, %44, %cst_37 {dimension_numbers = #tpu.dot_dimension_numbers<[1], [0], [0], [1], [0, 0, 1, 1], [], []>} : vector<32x160xf32>, vector<160x32xf32>, vector<32x32xf32> -> vector<32x32xf32>
    %c1_38 = arith.constant 1 : index
    %c0_39 = arith.constant 0 : index
    %46 = vector.load %arg3[%c1_38, %c0_39] : memref<5x32xf32, #tpu.memory_space<vmem>>, vector<1x32xf32>
    %47 = vector.broadcast %46 : vector<1x32xf32> to vector<32x32xf32>
    %48 = arith.addf %45, %47 : vector<32x32xf32>
    %cst_40 = arith.constant 0.000000e+00 : f32
    %49 = vector.broadcast %cst_40 : f32 to vector<32x32xf32>
    %50 = arith.maximumf %48, %49 : vector<32x32xf32>
    %cst_41 = arith.constant dense<0.000000e+00> : vector<1x32xf32>
    %51 = tpu.matmul %0, %50, %cst_41 {dimension_numbers = #tpu.dot_dimension_numbers<[1], [0], [0], [1], [0, 0, 1, 1], [], []>} : vector<1x32xf32>, vector<32x32xf32>, vector<1x32xf32> -> vector<1x32xf32>
    %52 = arith.mulf %50, %50 : vector<32x32xf32>
    %cst_42 = arith.constant dense<0.000000e+00> : vector<1x32xf32>
    %53 = tpu.matmul %0, %52, %cst_42 {dimension_numbers = #tpu.dot_dimension_numbers<[1], [0], [0], [1], [0, 0, 1, 1], [], []>} : vector<1x32xf32>, vector<32x32xf32>, vector<1x32xf32> -> vector<1x32xf32>
    %cst_43 = arith.constant 3.125000e-02 : f32
    %54 = vector.broadcast %cst_43 : f32 to vector<1x32xf32>
    %55 = arith.mulf %51, %54 : vector<1x32xf32>
    %cst_44 = arith.constant 3.125000e-02 : f32
    %56 = vector.broadcast %cst_44 : f32 to vector<1x32xf32>
    %57 = arith.mulf %53, %56 : vector<1x32xf32>
    %58 = arith.mulf %55, %55 : vector<1x32xf32>
    %59 = arith.subf %57, %58 : vector<1x32xf32>
    %cst_45 = arith.constant 0.000000e+00 : f32
    %60 = vector.broadcast %cst_45 : f32 to vector<1x32xf32>
    %61 = arith.maximumf %59, %60 : vector<1x32xf32>
    %c1_46 = arith.constant 1 : index
    %c0_47 = arith.constant 0 : index
    %62 = vector.load %arg4[%c1_46, %c0_47] : memref<5x32xf32, #tpu.memory_space<vmem>>, vector<1x32xf32>
    %cst_48 = arith.constant 9.99999974E-6 : f32
    %63 = vector.broadcast %cst_48 : f32 to vector<1x32xf32>
    %64 = arith.addf %61, %63 : vector<1x32xf32>
    %65 = math.rsqrt %64 : vector<1x32xf32>
    %66 = arith.mulf %62, %65 : vector<1x32xf32>
    %c1_49 = arith.constant 1 : index
    %c0_50 = arith.constant 0 : index
    %67 = vector.load %arg5[%c1_49, %c0_50] : memref<5x32xf32, #tpu.memory_space<vmem>>, vector<1x32xf32>
    %68 = arith.mulf %55, %66 : vector<1x32xf32>
    %69 = arith.subf %67, %68 : vector<1x32xf32>
    %70 = vector.broadcast %66 : vector<1x32xf32> to vector<32x32xf32>
    %71 = arith.mulf %50, %70 : vector<32x32xf32>
    %72 = vector.broadcast %69 : vector<1x32xf32> to vector<32x32xf32>
    %73 = arith.addf %71, %72 : vector<32x32xf32>
    %74 = vector.shape_cast %73 : vector<32x32xf32> to vector<2x16x32xf32>
    %c0_51 = arith.constant 0 : index
    %c2_52 = arith.constant 2 : index
    %c0_53 = arith.constant 0 : index
    %75 = vector.load %arg7[%c0_51, %c2_52, %c0_53] : memref<2x20x32xf32, #tpu.memory_space<vmem>>, vector<2x16x32xf32>
    tpu.vector_store %arg7[%c0_51, %c2_52, %c0_53], %74 {strides = array<i32>} : memref<2x20x32xf32, #tpu.memory_space<vmem>>, vector<2x16x32xf32>,
    %c0_54 = arith.constant 0 : index
    %c0_55 = arith.constant 0 : index
    %c0_56 = arith.constant 0 : index
    %76 = vector.load %arg7[%c0_54, %c0_55, %c0_56] : memref<2x20x32xf32, #tpu.memory_space<vmem>>, vector<2x16x32xf32>
    %77 = vector.shape_cast %76 : vector<2x16x32xf32> to vector<32x32xf32>
    %c0_57 = arith.constant 0 : index
    %c1_58 = arith.constant 1 : index
    %c0_59 = arith.constant 0 : index
    %78 = vector.load %arg7[%c0_57, %c1_58, %c0_59] : memref<2x20x32xf32, #tpu.memory_space<vmem>>, vector<2x16x32xf32>
    %79 = vector.shape_cast %78 : vector<2x16x32xf32> to vector<32x32xf32>
    %c0_60 = arith.constant 0 : index
    %c2_61 = arith.constant 2 : index
    %c0_62 = arith.constant 0 : index
    %80 = vector.load %arg7[%c0_60, %c2_61, %c0_62] : memref<2x20x32xf32, #tpu.memory_space<vmem>>, vector<2x16x32xf32>
    %81 = vector.shape_cast %80 : vector<2x16x32xf32> to vector<32x32xf32>
    %c0_63 = arith.constant 0 : index
    %c3_64 = arith.constant 3 : index
    %c0_65 = arith.constant 0 : index
    %82 = vector.load %arg7[%c0_63, %c3_64, %c0_65] : memref<2x20x32xf32, #tpu.memory_space<vmem>>, vector<2x16x32xf32>
    %83 = vector.shape_cast %82 : vector<2x16x32xf32> to vector<32x32xf32>
    %c0_66 = arith.constant 0 : index
    %c4_67 = arith.constant 4 : index
    %c0_68 = arith.constant 0 : index
    %84 = vector.load %arg7[%c0_66, %c4_67, %c0_68] : memref<2x20x32xf32, #tpu.memory_space<vmem>>, vector<2x16x32xf32>
    %85 = vector.shape_cast %84 : vector<2x16x32xf32> to vector<32x32xf32>
    %86 = tpu.concatenate %77, %79, %81, %83, %85 in 1 : vector<32x32xf32>, vector<32x32xf32>, vector<32x32xf32>, vector<32x32xf32>, vector<32x32xf32> -> vector<32x160xf32>
    %c1_69 = arith.constant 1 : index
    %c0_70 = arith.constant 0 : index
    %c0_71 = arith.constant 0 : index
    %87 = vector.load %arg2[%c1_69, %c0_70, %c0_71] : memref<4x160x32xf32, #tpu.memory_space<vmem>>, vector<1x160x32xf32>
    %88 = vector.shape_cast %87 : vector<1x160x32xf32> to vector<160x32xf32>
    %cst_72 = arith.constant dense<0.000000e+00> : vector<32x32xf32>
    %89 = tpu.matmul %86, %88, %cst_72 {dimension_numbers = #tpu.dot_dimension_numbers<[1], [0], [0], [1], [0, 0, 1, 1], [], []>} : vector<32x160xf32>, vector<160x32xf32>, vector<32x32xf32> -> vector<32x32xf32>
    %c2_73 = arith.constant 2 : index
    %c0_74 = arith.constant 0 : index
    %90 = vector.load %arg3[%c2_73, %c0_74] : memref<5x32xf32, #tpu.memory_space<vmem>>, vector<1x32xf32>
    %91 = vector.broadcast %90 : vector<1x32xf32> to vector<32x32xf32>
    %92 = arith.addf %89, %91 : vector<32x32xf32>
    %cst_75 = arith.constant 0.000000e+00 : f32
    %93 = vector.broadcast %cst_75 : f32 to vector<32x32xf32>
    %94 = arith.maximumf %92, %93 : vector<32x32xf32>
    %cst_76 = arith.constant dense<0.000000e+00> : vector<1x32xf32>
    %95 = tpu.matmul %0, %94, %cst_76 {dimension_numbers = #tpu.dot_dimension_numbers<[1], [0], [0], [1], [0, 0, 1, 1], [], []>} : vector<1x32xf32>, vector<32x32xf32>, vector<1x32xf32> -> vector<1x32xf32>
    %96 = arith.mulf %94, %94 : vector<32x32xf32>
    %cst_77 = arith.constant dense<0.000000e+00> : vector<1x32xf32>
    %97 = tpu.matmul %0, %96, %cst_77 {dimension_numbers = #tpu.dot_dimension_numbers<[1], [0], [0], [1], [0, 0, 1, 1], [], []>} : vector<1x32xf32>, vector<32x32xf32>, vector<1x32xf32> -> vector<1x32xf32>
    %cst_78 = arith.constant 3.125000e-02 : f32
    %98 = vector.broadcast %cst_78 : f32 to vector<1x32xf32>
    %99 = arith.mulf %95, %98 : vector<1x32xf32>
    %cst_79 = arith.constant 3.125000e-02 : f32
    %100 = vector.broadcast %cst_79 : f32 to vector<1x32xf32>
    %101 = arith.mulf %97, %100 : vector<1x32xf32>
    %102 = arith.mulf %99, %99 : vector<1x32xf32>
    %103 = arith.subf %101, %102 : vector<1x32xf32>
    %cst_80 = arith.constant 0.000000e+00 : f32
    %104 = vector.broadcast %cst_80 : f32 to vector<1x32xf32>
    %105 = arith.maximumf %103, %104 : vector<1x32xf32>
    %c2_81 = arith.constant 2 : index
    %c0_82 = arith.constant 0 : index
    %106 = vector.load %arg4[%c2_81, %c0_82] : memref<5x32xf32, #tpu.memory_space<vmem>>, vector<1x32xf32>
    %cst_83 = arith.constant 9.99999974E-6 : f32
    %107 = vector.broadcast %cst_83 : f32 to vector<1x32xf32>
    %108 = arith.addf %105, %107 : vector<1x32xf32>
    %109 = math.rsqrt %108 : vector<1x32xf32>
    %110 = arith.mulf %106, %109 : vector<1x32xf32>
    %c2_84 = arith.constant 2 : index
    %c0_85 = arith.constant 0 : index
    %111 = vector.load %arg5[%c2_84, %c0_85] : memref<5x32xf32, #tpu.memory_space<vmem>>, vector<1x32xf32>
    %112 = arith.mulf %99, %110 : vector<1x32xf32>
    %113 = arith.subf %111, %112 : vector<1x32xf32>
    %114 = vector.broadcast %110 : vector<1x32xf32> to vector<32x32xf32>
    %115 = arith.mulf %94, %114 : vector<32x32xf32>
    %116 = vector.broadcast %113 : vector<1x32xf32> to vector<32x32xf32>
    %117 = arith.addf %115, %116 : vector<32x32xf32>
    %118 = arith.addf %117, %29 : vector<32x32xf32>
    %119 = vector.shape_cast %118 : vector<32x32xf32> to vector<2x16x32xf32>
    %c0_86 = arith.constant 0 : index
    %c2_87 = arith.constant 2 : index
    %c0_88 = arith.constant 0 : index
    %120 = vector.load %arg7[%c0_86, %c2_87, %c0_88] : memref<2x20x32xf32, #tpu.memory_space<vmem>>, vector<2x16x32xf32>
    tpu.vector_store %arg7[%c0_86, %c2_87, %c0_88], %119 {strides = array<i32>} : memref<2x20x32xf32, #tpu.memory_space<vmem>>, vector<2x16x32xf32>,
    %c0_89 = arith.constant 0 : index
    %c0_90 = arith.constant 0 : index
    %c0_91 = arith.constant 0 : index
    %121 = vector.load %arg7[%c0_89, %c0_90, %c0_91] : memref<2x20x32xf32, #tpu.memory_space<vmem>>, vector<2x16x32xf32>
    %122 = vector.shape_cast %121 : vector<2x16x32xf32> to vector<32x32xf32>
    %c0_92 = arith.constant 0 : index
    %c1_93 = arith.constant 1 : index
    %c0_94 = arith.constant 0 : index
    %123 = vector.load %arg7[%c0_92, %c1_93, %c0_94] : memref<2x20x32xf32, #tpu.memory_space<vmem>>, vector<2x16x32xf32>
    %124 = vector.shape_cast %123 : vector<2x16x32xf32> to vector<32x32xf32>
    %c0_95 = arith.constant 0 : index
    %c2_96 = arith.constant 2 : index
    %c0_97 = arith.constant 0 : index
    %125 = vector.load %arg7[%c0_95, %c2_96, %c0_97] : memref<2x20x32xf32, #tpu.memory_space<vmem>>, vector<2x16x32xf32>
    %126 = vector.shape_cast %125 : vector<2x16x32xf32> to vector<32x32xf32>
    %c0_98 = arith.constant 0 : index
    %c3_99 = arith.constant 3 : index
    %c0_100 = arith.constant 0 : index
    %127 = vector.load %arg7[%c0_98, %c3_99, %c0_100] : memref<2x20x32xf32, #tpu.memory_space<vmem>>, vector<2x16x32xf32>
    %128 = vector.shape_cast %127 : vector<2x16x32xf32> to vector<32x32xf32>
    %c0_101 = arith.constant 0 : index
    %c4_102 = arith.constant 4 : index
    %c0_103 = arith.constant 0 : index
    %129 = vector.load %arg7[%c0_101, %c4_102, %c0_103] : memref<2x20x32xf32, #tpu.memory_space<vmem>>, vector<2x16x32xf32>
    %130 = vector.shape_cast %129 : vector<2x16x32xf32> to vector<32x32xf32>
    %131 = tpu.concatenate %122, %124, %126, %128, %130 in 1 : vector<32x32xf32>, vector<32x32xf32>, vector<32x32xf32>, vector<32x32xf32>, vector<32x32xf32> -> vector<32x160xf32>
    %c2_104 = arith.constant 2 : index
    %c0_105 = arith.constant 0 : index
    %c0_106 = arith.constant 0 : index
    %132 = vector.load %arg2[%c2_104, %c0_105, %c0_106] : memref<4x160x32xf32, #tpu.memory_space<vmem>>, vector<1x160x32xf32>
    %133 = vector.shape_cast %132 : vector<1x160x32xf32> to vector<160x32xf32>
    %cst_107 = arith.constant dense<0.000000e+00> : vector<32x32xf32>
    %134 = tpu.matmul %131, %133, %cst_107 {dimension_numbers = #tpu.dot_dimension_numbers<[1], [0], [0], [1], [0, 0, 1, 1], [], []>} : vector<32x160xf32>, vector<160x32xf32>, vector<32x32xf32> -> vector<32x32xf32>
    %c3_108 = arith.constant 3 : index
    %c0_109 = arith.constant 0 : index
    %135 = vector.load %arg3[%c3_108, %c0_109] : memref<5x32xf32, #tpu.memory_space<vmem>>, vector<1x32xf32>
    %136 = vector.broadcast %135 : vector<1x32xf32> to vector<32x32xf32>
    %137 = arith.addf %134, %136 : vector<32x32xf32>
    %cst_110 = arith.constant 0.000000e+00 : f32
    %138 = vector.broadcast %cst_110 : f32 to vector<32x32xf32>
    %139 = arith.maximumf %137, %138 : vector<32x32xf32>
    %cst_111 = arith.constant dense<0.000000e+00> : vector<1x32xf32>
    %140 = tpu.matmul %0, %139, %cst_111 {dimension_numbers = #tpu.dot_dimension_numbers<[1], [0], [0], [1], [0, 0, 1, 1], [], []>} : vector<1x32xf32>, vector<32x32xf32>, vector<1x32xf32> -> vector<1x32xf32>
    %141 = arith.mulf %139, %139 : vector<32x32xf32>
    %cst_112 = arith.constant dense<0.000000e+00> : vector<1x32xf32>
    %142 = tpu.matmul %0, %141, %cst_112 {dimension_numbers = #tpu.dot_dimension_numbers<[1], [0], [0], [1], [0, 0, 1, 1], [], []>} : vector<1x32xf32>, vector<32x32xf32>, vector<1x32xf32> -> vector<1x32xf32>
    %cst_113 = arith.constant 3.125000e-02 : f32
    %143 = vector.broadcast %cst_113 : f32 to vector<1x32xf32>
    %144 = arith.mulf %140, %143 : vector<1x32xf32>
    %cst_114 = arith.constant 3.125000e-02 : f32
    %145 = vector.broadcast %cst_114 : f32 to vector<1x32xf32>
    %146 = arith.mulf %142, %145 : vector<1x32xf32>
    %147 = arith.mulf %144, %144 : vector<1x32xf32>
    %148 = arith.subf %146, %147 : vector<1x32xf32>
    %cst_115 = arith.constant 0.000000e+00 : f32
    %149 = vector.broadcast %cst_115 : f32 to vector<1x32xf32>
    %150 = arith.maximumf %148, %149 : vector<1x32xf32>
    %c3_116 = arith.constant 3 : index
    %c0_117 = arith.constant 0 : index
    %151 = vector.load %arg4[%c3_116, %c0_117] : memref<5x32xf32, #tpu.memory_space<vmem>>, vector<1x32xf32>
    %cst_118 = arith.constant 9.99999974E-6 : f32
    %152 = vector.broadcast %cst_118 : f32 to vector<1x32xf32>
    %153 = arith.addf %150, %152 : vector<1x32xf32>
    %154 = math.rsqrt %153 : vector<1x32xf32>
    %155 = arith.mulf %151, %154 : vector<1x32xf32>
    %c3_119 = arith.constant 3 : index
    %c0_120 = arith.constant 0 : index
    %156 = vector.load %arg5[%c3_119, %c0_120] : memref<5x32xf32, #tpu.memory_space<vmem>>, vector<1x32xf32>
    %157 = arith.mulf %144, %155 : vector<1x32xf32>
    %158 = arith.subf %156, %157 : vector<1x32xf32>
    %159 = vector.broadcast %155 : vector<1x32xf32> to vector<32x32xf32>
    %160 = arith.mulf %139, %159 : vector<32x32xf32>
    %161 = vector.broadcast %158 : vector<1x32xf32> to vector<32x32xf32>
    %162 = arith.addf %160, %161 : vector<32x32xf32>
    %163 = vector.shape_cast %162 : vector<32x32xf32> to vector<2x16x32xf32>
    %c0_121 = arith.constant 0 : index
    %c2_122 = arith.constant 2 : index
    %c0_123 = arith.constant 0 : index
    %164 = vector.load %arg7[%c0_121, %c2_122, %c0_123] : memref<2x20x32xf32, #tpu.memory_space<vmem>>, vector<2x16x32xf32>
    tpu.vector_store %arg7[%c0_121, %c2_122, %c0_123], %163 {strides = array<i32>} : memref<2x20x32xf32, #tpu.memory_space<vmem>>, vector<2x16x32xf32>,
    %c0_124 = arith.constant 0 : index
    %c0_125 = arith.constant 0 : index
    %c0_126 = arith.constant 0 : index
    %165 = vector.load %arg7[%c0_124, %c0_125, %c0_126] : memref<2x20x32xf32, #tpu.memory_space<vmem>>, vector<2x16x32xf32>
    %166 = vector.shape_cast %165 : vector<2x16x32xf32> to vector<32x32xf32>
    %c0_127 = arith.constant 0 : index
    %c1_128 = arith.constant 1 : index
    %c0_129 = arith.constant 0 : index
    %167 = vector.load %arg7[%c0_127, %c1_128, %c0_129] : memref<2x20x32xf32, #tpu.memory_space<vmem>>, vector<2x16x32xf32>
    %168 = vector.shape_cast %167 : vector<2x16x32xf32> to vector<32x32xf32>
    %c0_130 = arith.constant 0 : index
    %c2_131 = arith.constant 2 : index
    %c0_132 = arith.constant 0 : index
    %169 = vector.load %arg7[%c0_130, %c2_131, %c0_132] : memref<2x20x32xf32, #tpu.memory_space<vmem>>, vector<2x16x32xf32>
    %170 = vector.shape_cast %169 : vector<2x16x32xf32> to vector<32x32xf32>
    %c0_133 = arith.constant 0 : index
    %c3_134 = arith.constant 3 : index
    %c0_135 = arith.constant 0 : index
    %171 = vector.load %arg7[%c0_133, %c3_134, %c0_135] : memref<2x20x32xf32, #tpu.memory_space<vmem>>, vector<2x16x32xf32>
    %172 = vector.shape_cast %171 : vector<2x16x32xf32> to vector<32x32xf32>
    %c0_136 = arith.constant 0 : index
    %c4_137 = arith.constant 4 : index
    %c0_138 = arith.constant 0 : index
    %173 = vector.load %arg7[%c0_136, %c4_137, %c0_138] : memref<2x20x32xf32, #tpu.memory_space<vmem>>, vector<2x16x32xf32>
    %174 = vector.shape_cast %173 : vector<2x16x32xf32> to vector<32x32xf32>
    %175 = tpu.concatenate %166, %168, %170, %172, %174 in 1 : vector<32x32xf32>, vector<32x32xf32>, vector<32x32xf32>, vector<32x32xf32>, vector<32x32xf32> -> vector<32x160xf32>
    %c3_139 = arith.constant 3 : index
    %c0_140 = arith.constant 0 : index
    %c0_141 = arith.constant 0 : index
    %176 = vector.load %arg2[%c3_139, %c0_140, %c0_141] : memref<4x160x32xf32, #tpu.memory_space<vmem>>, vector<1x160x32xf32>
    %177 = vector.shape_cast %176 : vector<1x160x32xf32> to vector<160x32xf32>
    %cst_142 = arith.constant dense<0.000000e+00> : vector<32x32xf32>
    %178 = tpu.matmul %175, %177, %cst_142 {dimension_numbers = #tpu.dot_dimension_numbers<[1], [0], [0], [1], [0, 0, 1, 1], [], []>} : vector<32x160xf32>, vector<160x32xf32>, vector<32x32xf32> -> vector<32x32xf32>
    %c4_143 = arith.constant 4 : index
    %c0_144 = arith.constant 0 : index
    %179 = vector.load %arg3[%c4_143, %c0_144] : memref<5x32xf32, #tpu.memory_space<vmem>>, vector<1x32xf32>
    %180 = vector.broadcast %179 : vector<1x32xf32> to vector<32x32xf32>
    %181 = arith.addf %178, %180 : vector<32x32xf32>
    %cst_145 = arith.constant 0.000000e+00 : f32
    %182 = vector.broadcast %cst_145 : f32 to vector<32x32xf32>
    %183 = arith.maximumf %181, %182 : vector<32x32xf32>
    %cst_146 = arith.constant dense<0.000000e+00> : vector<1x32xf32>
    %184 = tpu.matmul %0, %183, %cst_146 {dimension_numbers = #tpu.dot_dimension_numbers<[1], [0], [0], [1], [0, 0, 1, 1], [], []>} : vector<1x32xf32>, vector<32x32xf32>, vector<1x32xf32> -> vector<1x32xf32>
    %185 = arith.mulf %183, %183 : vector<32x32xf32>
    %cst_147 = arith.constant dense<0.000000e+00> : vector<1x32xf32>
    %186 = tpu.matmul %0, %185, %cst_147 {dimension_numbers = #tpu.dot_dimension_numbers<[1], [0], [0], [1], [0, 0, 1, 1], [], []>} : vector<1x32xf32>, vector<32x32xf32>, vector<1x32xf32> -> vector<1x32xf32>
    %cst_148 = arith.constant 3.125000e-02 : f32
    %187 = vector.broadcast %cst_148 : f32 to vector<1x32xf32>
    %188 = arith.mulf %184, %187 : vector<1x32xf32>
    %cst_149 = arith.constant 3.125000e-02 : f32
    %189 = vector.broadcast %cst_149 : f32 to vector<1x32xf32>
    %190 = arith.mulf %186, %189 : vector<1x32xf32>
    %191 = arith.mulf %188, %188 : vector<1x32xf32>
    %192 = arith.subf %190, %191 : vector<1x32xf32>
    %cst_150 = arith.constant 0.000000e+00 : f32
    %193 = vector.broadcast %cst_150 : f32 to vector<1x32xf32>
    %194 = arith.maximumf %192, %193 : vector<1x32xf32>
    %c4_151 = arith.constant 4 : index
    %c0_152 = arith.constant 0 : index
    %195 = vector.load %arg4[%c4_151, %c0_152] : memref<5x32xf32, #tpu.memory_space<vmem>>, vector<1x32xf32>
    %cst_153 = arith.constant 9.99999974E-6 : f32
    %196 = vector.broadcast %cst_153 : f32 to vector<1x32xf32>
    %197 = arith.addf %194, %196 : vector<1x32xf32>
    %198 = math.rsqrt %197 : vector<1x32xf32>
    %199 = arith.mulf %195, %198 : vector<1x32xf32>
    %c4_154 = arith.constant 4 : index
    %c0_155 = arith.constant 0 : index
    %200 = vector.load %arg5[%c4_154, %c0_155] : memref<5x32xf32, #tpu.memory_space<vmem>>, vector<1x32xf32>
    %201 = arith.mulf %188, %199 : vector<1x32xf32>
    %202 = arith.subf %200, %201 : vector<1x32xf32>
    %203 = vector.broadcast %199 : vector<1x32xf32> to vector<32x32xf32>
    %204 = arith.mulf %183, %203 : vector<32x32xf32>
    %205 = vector.broadcast %202 : vector<1x32xf32> to vector<32x32xf32>
    %206 = arith.addf %204, %205 : vector<32x32xf32>
    %207 = arith.addf %206, %118 : vector<32x32xf32>
    %c0_156 = arith.constant 0 : index
    %c0_157 = arith.constant 0 : index
    %208 = vector.load %arg8[%c0_156, %c0_157] : memref<32x32xf32, #tpu.memory_space<vmem>>, vector<32x32xf32>
    tpu.vector_store %arg8[%c0_156, %c0_157], %207 {strides = array<i32>} : memref<32x32xf32, #tpu.memory_space<vmem>>, vector<32x32xf32>,
    %c0_158 = arith.constant 0 : index
    %c0_159 = arith.constant 0 : index
    %209 = tpu.strided_load %arg8[%c0_158, %c0_159] {strides = array<i32: 2, 1>} : memref<32x32xf32, #tpu.memory_space<vmem>>, vector<16x32xf32>
    %c1_160 = arith.constant 1 : index
    %c0_161 = arith.constant 0 : index
    %210 = tpu.strided_load %arg8[%c1_160, %c0_161] {strides = array<i32: 2, 1>} : memref<32x32xf32, #tpu.memory_space<vmem>>, vector<16x32xf32>
    %211 = arith.maximumf %209, %210 : vector<16x32xf32>
    %c0_162 = arith.constant 0 : index
    %c0_163 = arith.constant 0 : index
    %212 = vector.load %arg6[%c0_162, %c0_163] : memref<16x32xf32, #tpu.memory_space<vmem>>, vector<16x32xf32>
    tpu.vector_store %arg6[%c0_162, %c0_163], %211 {strides = array<i32>} : memref<16x32xf32, #tpu.memory_space<vmem>>, vector<16x32xf32>,
    return
  }
}

</mosaic_0001>

<llo_original>
// kernel: residual_stack_forward.1
$region0: #{residual_stack_forward.1}
  #allocation0 [shape = 'u32[]', space=smem, size = 0x4, offset = 0x4, fixed_abs, tag = 'smem constant byte address 0x4 - core index']
  #allocation1 [shape = 'u32[144,128]{1,0:T(1,128)}', space=vmem, size = 0x12000, scoped, tag = 'internal scratch']
  #allocation2 [shape = 'f32[2,20,32]{2,1,0:T(8,128)}', space=vmem, size = 0x6000, scoped, tag = 'scratch operand']
  #allocation3 [shape = 'f32[32,32]{1,0:T(8,128)}', space=vmem, size = 0x4000, scoped, tag = 'scratch operand']
  %s0 = inlined_call_operand.hbm [shape: f32[32,32], index: 0, kind: input, shape index: {}]
  %s1 = inlined_call_operand.hbm [shape: f32[32,32], index: 1, kind: input, shape index: {}]
  %s2 = inlined_call_operand.hbm [shape: f32[4,160,32], index: 2, kind: input, shape index: {}]
  %s3 = inlined_call_operand.vmem [shape: f32[5,32], index: 3, kind: input, shape index: {}]
  %s4 = inlined_call_operand.hbm [shape: f32[5,32], index: 4, kind: input, shape index: {}]
  %s5 = inlined_call_operand.hbm [shape: f32[5,32], index: 5, kind: input, shape index: {}]
  %s6 = inlined_call_operand.hbm [shape: f32[16,32], index: 6, kind: output, shape index: {}]
  %s7 = sld [smem:[#allocation0]]
  $region54: #{residual_stack_forward.1} parent=0
    _
  %s9 = ssub.s32 1, %s7
  %s10 = scalar_select 0, %s9, %s7
  $region1: #{residual_stack_forward.1} parent=0
    #allocation4 [shape = 'u8[16384]{0}', space=vmem, size = 0x4000, scoped, tag = 'input window, operand 0, single buffered']
    #allocation5 [shape = 's32[1]{0}', space=sflag, size = 0x4, scoped, tag = 'scoped memory for residual_stack_forward.1']
    #allocation6 [shape = 's32[1]{0}', space=sflag, size = 0x4, scoped, tag = 'scoped memory for residual_stack_forward.1']
    #allocation7 [shape = 'u8[16384]{0}', space=vmem, size = 0x4000, scoped, tag = 'input window, operand 1, single buffered']
    #allocation8 [shape = 's32[1]{0}', space=sflag, size = 0x4, scoped, tag = 'scoped memory for residual_stack_forward.1']
    #allocation9 [shape = 'u8[327680]{0}', space=vmem, size = 0x50000, scoped, tag = 'input window, operand 2, single buffered']
    #allocation10 [shape = 'u8[4096]{0}', space=vmem, size = 0x1000, scoped, tag = 'input window, operand 4, single buffered']
    #allocation11 [shape = 's32[1]{0}', space=sflag, size = 0x4, scoped, tag = 'scoped memory for residual_stack_forward.1']
    #allocation12 [shape = 'u8[4096]{0}', space=vmem, size = 0x1000, scoped, tag = 'input window, operand 5, single buffered']
    #allocation13 [shape = 'u8[8192]{0}', space=vmem, size = 0x2000, scoped, tag = 'output window, operand 0, single buffered']
    %11 = vsyncpa [#allocation5], 0
    %12 = vsyncpa [#allocation8], 0
    %13 = vsyncpa [#allocation11], 0
    %14 = vsyncpa [#allocation6], 0
    // Predicated region
    $region2: #{residual_stack_forward.1} parent=1 // pred_check
      _
    $region3: #{residual_stack_forward.1} parent=1 // pred_check_branch
      %16 = sbr.rel (0) target = $region5
    $region4: #{residual_stack_forward.1} parent=1 // pred_region
      %s18 = ssub.s32 512, 512
      %19 = vsyncadd [#allocation5], %s18
      %s20 = sshll.u32 [#allocation4], 4
      %s21 = int_to_ptr.vmem [resolvable:$true] %s20
      %26 = dma.hbm_to_vmem [thread:$0]  %s0, 512, %s21, [#allocation5], 128, 128, 8
    $region5: #{residual_stack_forward.1} parent=1 // pred_fallthru
      _
    // Predicated region
    $region6: #{residual_stack_forward.1} parent=1 // pred_check
      _
    $region7: #{residual_stack_forward.1} parent=1 // pred_check_branch
      %28 = sbr.rel (0) target = $region9
    $region8: #{residual_stack_forward.1} parent=1 // pred_region
      %s30 = ssub.s32 512, 512
      %31 = vsyncadd [#allocation8], %s30
      %s32 = sshll.u32 [#allocation7], 4
      %s33 = int_to_ptr.vmem [resolvable:$true] %s32
      %38 = dma.hbm_to_vmem [thread:$0]  %s1, 512, %s33, [#allocation8], 128, 128, 8
    $region9: #{residual_stack_forward.1} parent=1 // pred_fallthru
      _
    // Predicated region
    $region10: #{residual_stack_forward.1} parent=1 // pred_check
      _
    $region11: #{residual_stack_forward.1} parent=1 // pred_check_branch
      %40 = sbr.rel (0) target = $region13
    $region12: #{residual_stack_forward.1} parent=1 // pred_region
      %s42 = ssub.s32 10240, 10240
      %43 = vsyncadd [#allocation8], %s42
      %s44 = sshll.u32 [#allocation9], 4
      %s45 = int_to_ptr.vmem [resolvable:$true] %s44
      %50 = dma.hbm_to_vmem [thread:$0]  %s2, 10240, %s45, [#allocation8], 128, 128, 8
    $region13: #{residual_stack_forward.1} parent=1 // pred_fallthru
      _
    // Predicated region
    $region14: #{residual_stack_forward.1} parent=1 // pred_check
      _
    $region15: #{residual_stack_forward.1} parent=1 // pred_check_branch
      %52 = sbr.rel (0) target = $region17
    $region16: #{residual_stack_forward.1} parent=1 // pred_region
      _
    $region17: #{residual_stack_forward.1} parent=1 // pred_fallthru
      _
    // Predicated region
    $region18: #{residual_stack_forward.1} parent=1 // pred_check
      _
    $region19: #{residual_stack_forward.1} parent=1 // pred_check_branch
      %54 = sbr.rel (0) target = $region21
    $region20: #{residual_stack_forward.1} parent=1 // pred_region
      %s56 = ssub.s32 128, 128
      %57 = vsyncadd [#allocation11], %s56
      %s59 = sshll.u32 [#allocation10], 4
      %s60 = int_to_ptr.vmem [resolvable:$true] %s59
      %62 = dma.hbm_to_vmem [thread:$0]  %s4, 128, %s60, [#allocation11]
    $region21: #{residual_stack_forward.1} parent=1 // pred_fallthru
      _
    // Predicated region
    $region22: #{residual_stack_forward.1} parent=1 // pred_check
      _
    $region23: #{residual_stack_forward.1} parent=1 // pred_check_branch
      %64 = sbr.rel (0) target = $region25
    $region24: #{residual_stack_forward.1} parent=1 // pred_region
      %s66 = ssub.s32 128, 128
      %67 = vsyncadd [#allocation11], %s66
      %s69 = sshll.u32 [#allocation12], 4
      %s70 = int_to_ptr.vmem [resolvable:$true] %s69
      %72 = dma.hbm_to_vmem [thread:$0]  %s5, 128, %s70, [#allocation11]
    $region25: #{residual_stack_forward.1} parent=1 // pred_fallthru
      _
    // Predicated region
    $region26: #{residual_stack_forward.1} parent=1 // pred_check
      _
    $region27: #{residual_stack_forward.1} parent=1 // pred_check_branch
      %74 = sbr.rel (0) target = $region29
    $region28: #{residual_stack_forward.1} parent=1 // pred_region
      %75 = dma.done [#allocation5], 512
    $region29: #{residual_stack_forward.1} parent=1 // pred_fallthru
      _
    // Predicated region
    $region30: #{residual_stack_forward.1} parent=1 // pred_check
      _
    $region31: #{residual_stack_forward.1} parent=1 // pred_check_branch
      %77 = sbr.rel (0) target = $region33
    $region32: #{residual_stack_forward.1} parent=1 // pred_region
      %78 = dma.done [#allocation8], 512
    $region33: #{residual_stack_forward.1} parent=1 // pred_fallthru
      _
    // Predicated region
    $region34: #{residual_stack_forward.1} parent=1 // pred_check
      _
    $region35: #{residual_stack_forward.1} parent=1 // pred_check_branch
      %80 = sbr.rel (0) target = $region37
    $region36: #{residual_stack_forward.1} parent=1 // pred_region
      %81 = dma.done [#allocation8], 10240
    $region37: #{residual_stack_forward.1} parent=1 // pred_fallthru
      _
    // Predicated region
    $region38: #{residual_stack_forward.1} parent=1 // pred_check
      _
    $region39: #{residual_stack_forward.1} parent=1 // pred_check_branch
      %83 = sbr.rel (0) target = $region41
    $region40: #{residual_stack_forward.1} parent=1 // pred_region
      %84 = dma.done [#allocation11], 128
    $region41: #{residual_stack_forward.1} parent=1 // pred_fallthru
      _
    // Predicated region
    $region42: #{residual_stack_forward.1} parent=1 // pred_check
      _
    $region43: #{residual_stack_forward.1} parent=1 // pred_check_branch
      %86 = sbr.rel (0) target = $region45
    $region44: #{residual_stack_forward.1} parent=1 // pred_region
      %87 = dma.done [#allocation11], 128
    $region45: #{residual_stack_forward.1} parent=1 // pred_fallthru
      _
    %vm88 = vcmask 254976
    %89 = vst.msk [vmem:[#allocation2] sm:$0x3] %vm88, 0.0
    %90 = vst.msk [vmem:[#allocation2 + $0x18] sm:$0x3] %vm88, 0.0
    %91 = vst.msk [vmem:[#allocation2 + $0x12] sm:$0x3] %vm88, 0.0
    %92 = vst.msk [vmem:[#allocation2 + $0x2a] sm:$0x3] %vm88, 0.0
    %v93 = vld [vmem:[#allocation4] sm:$0xff]
    %v94 = vld [vmem:[#allocation4 + $0x8] sm:$0xff]
    %v95 = vld [vmem:[#allocation4 + $0x10] sm:$0xff]
    %v96 = vld [vmem:[#allocation4 + $0x18] sm:$0xff]
    %v97 = vld [vmem:[#allocation7] sm:$0xff]
    %v98 = vld [vmem:[#allocation7 + $0x8] sm:$0xff]
    %v99 = vld [vmem:[#allocation7 + $0x10] sm:$0xff]
    %v100 = vld [vmem:[#allocation7 + $0x18] sm:$0xff]
    %vm101 = vcmask 261120
    %v103 = vsel %vm101, %v93, 0
    %v106 = vsel %vm101, %v94, 0
    %v109 = vsel %vm101, %v95, 0
    %v112 = vsel %vm101, %v96, 0
    %114 = vmatprep.subr.mxu0 0.0
    %115 = vmatpush1.msra.mxu0 0.0
    %116 = vmatprep.subr.mxu0 0.0
    %117 = vmatpush1.msra.mxu0 0.0
    %118 = vmatprep.subr.mxu0 0.0
    %119 = vmatpush1.msra.mxu0 0.0
    %120 = vmatprep.subr.mxu0 0.0
    %121 = vmatpush1.msra.mxu0 0.0
    %122 = vmatprep.subr.mxu0 0.0
    %123 = vmatpush1.msra.mxu0 0.0
    %124 = vmatprep.subr.mxu0 0.0
    %125 = vmatpush1.msra.mxu0 0.0
    %126 = vmatprep.subr.mxu0 0.0
    %127 = vmatpush1.msra.mxu0 0.0
    %128 = vmatprep.subr.mxu0 0.0
    %129 = vmatpush1.msra.mxu0 0.0
    %130 = vmatprep.subr.mxu0 0.0
    %131 = vmatpush1.msra.mxu0 0.0
    %132 = vmatprep.subr.mxu0 0.0
    %133 = vmatpush1.msra.mxu0 0.0
    %134 = vmatprep.subr.mxu0 0.0
    %135 = vmatpush1.msra.mxu0 0.0
    %136 = vmatprep.subr.mxu0 0.0
    %137 = vmatpush1.msra.mxu0 0.0
    %138 = vmatprep.subr.mxu0 0.0
    %139 = vmatpush1.msra.mxu0 %v100
    %140 = vmatprep.subr.mxu0 0.0
    %141 = vmatpush1.msra.mxu0 %v99
    %142 = vmatprep.subr.mxu0 0.0
    %143 = vmatpush1.msra.mxu0 %v98
    %144 = vmatprep.subr.mxu0 0.0
    %145 = vmatpush1.msra.mxu0 %v97
    %146 = vmatprep.subr.mxu0 0.0
    %147 = vmatpush2.msra.mxu0 0.0
    %148 = vmatprep.subr.mxu0 0.0
    %149 = vmatpush2.msra.mxu0 0.0
    %150 = vmatprep.subr.mxu0 0.0
    %151 = vmatpush2.msra.mxu0 0.0
    %152 = vmatprep.subr.mxu0 0.0
    %153 = vmatpush2.msra.mxu0 0.0
    %154 = vmatprep.subr.mxu0 0.0
    %155 = vmatpush2.msra.mxu0 0.0
    %156 = vmatprep.subr.mxu0 0.0
    %157 = vmatpush2.msra.mxu0 0.0
    %158 = vmatprep.subr.mxu0 0.0
    %159 = vmatpush2.msra.mxu0 0.0
    %160 = vmatprep.subr.mxu0 0.0
    %161 = vmatpush2.msra.mxu0 0.0
    %162 = vmatprep.subr.mxu0 0.0
    %163 = vmatpush2.msra.mxu0 0.0
    %164 = vmatprep.subr.mxu0 0.0
    %165 = vmatpush2.msra.mxu0 0.0
    %166 = vmatprep.subr.mxu0 0.0
    %167 = vmatpush2.msra.mxu0 0.0
    %168 = vmatprep.subr.mxu0 0.0
    %169 = vmatpush2.msra.mxu0 0.0
    %170 = vmatprep.subr.mxu0 0.0
    %171 = vmatpush2.msra.mxu0 0.0
    %172 = vmatprep.subr.mxu0 0.0
    %173 = vmatpush2.msra.mxu0 0.0
    %174 = vmatprep.subr.mxu0 0.0
    %175 = vmatpush2.msra.mxu0 0.0
    %176 = vmatprep.subr.mxu0 0.0
    %177 = vmatpush2.msra.mxu0 0.0
    %178 = vmatprep.mubr.f32.mxu0 0.0
    %179 = vmatmul.mubr.f32.gmra.mxu0 %v103
    %v180 = vpop.f32.mrf.mxu0
    %v181 = vadd.f32 0.0, %v180
    %v182 = vpop.f32.mrf.mxu0
    %183 = vmatprep.mubr.f32.mxu0 0.0
    %184 = vmatmul.mubr.f32.gmra.mxu0 %v106
    %v185 = vpop.f32.mrf.mxu0
    %v186 = vadd.f32 0.0, %v185
    %v187 = vpop.f32.mrf.mxu0
    %188 = vmatprep.mubr.f32.mxu0 0.0
    %189 = vmatmul.mubr.f32.gmra.mxu0 %v109
    %v190 = vpop.f32.mrf.mxu0
    %v191 = vadd.f32 0.0, %v190
    %v192 = vpop.f32.mrf.mxu0
    %193 = vmatprep.mubr.f32.mxu0 0.0
    %194 = vmatmul.mubr.f32.gmra.mxu0 %v112
    %v195 = vpop.f32.mrf.mxu0
    %v196 = vadd.f32 0.0, %v195
    %v197 = vpop.f32.mrf.mxu0
    %198 = vdwg.mxu0
    %v200 = vsel %vm101, 1.0, 0
    %202 = vmatprep.subr.mxu0 0.0
    %203 = vmatpush1.msra.mxu0 0.0
    %204 = vmatprep.subr.mxu0 0.0
    %205 = vmatpush1.msra.mxu0 0.0
    %206 = vmatprep.subr.mxu0 0.0
    %207 = vmatpush1.msra.mxu0 0.0
    %208 = vmatprep.subr.mxu0 0.0
    %209 = vmatpush1.msra.mxu0 0.0
    %210 = vmatprep.subr.mxu0 0.0
    %211 = vmatpush1.msra.mxu0 0.0
    %212 = vmatprep.subr.mxu0 0.0
    %213 = vmatpush1.msra.mxu0 0.0
    %214 = vmatprep.subr.mxu0 0.0
    %215 = vmatpush1.msra.mxu0 0.0
    %216 = vmatprep.subr.mxu0 0.0
    %217 = vmatpush1.msra.mxu0 0.0
    %218 = vmatprep.subr.mxu0 0.0
    %219 = vmatpush1.msra.mxu0 0.0
    %220 = vmatprep.subr.mxu0 0.0
    %221 = vmatpush1.msra.mxu0 0.0
    %222 = vmatprep.subr.mxu0 0.0
    %223 = vmatpush1.msra.mxu0 0.0
    %224 = vmatprep.subr.mxu0 0.0
    %225 = vmatpush1.msra.mxu0 0.0
    %226 = vmatprep.subr.mxu0 0.0
    %227 = vmatpush1.msra.mxu0 %v196
    %228 = vmatprep.subr.mxu0 0.0
    %229 = vmatpush1.msra.mxu0 %v191
    %230 = vmatprep.subr.mxu0 0.0
    %231 = vmatpush1.msra.mxu0 %v186
    %232 = vmatprep.subr.mxu0 0.0
    %233 = vmatpush1.msra.mxu0 %v181
    %234 = vmatprep.subr.mxu0 0.0
    %235 = vmatpush2.msra.mxu0 0.0
    %236 = vmatprep.subr.mxu0 0.0
    %237 = vmatpush2.msra.mxu0 0.0
    %238 = vmatprep.subr.mxu0 0.0
    %239 = vmatpush2.msra.mxu0 0.0
    %240 = vmatprep.subr.mxu0 0.0
    %241 = vmatpush2.msra.mxu0 0.0
    %242 = vmatprep.subr.mxu0 0.0
    %243 = vmatpush2.msra.mxu0 0.0
    %244 = vmatprep.subr.mxu0 0.0
    %245 = vmatpush2.msra.mxu0 0.0
    %246 = vmatprep.subr.mxu0 0.0
    %247 = vmatpush2.msra.mxu0 0.0
    %248 = vmatprep.subr.mxu0 0.0
    %249 = vmatpush2.msra.mxu0 0.0
    %250 = vmatprep.subr.mxu0 0.0
    %251 = vmatpush2.msra.mxu0 0.0
    %252 = vmatprep.subr.mxu0 0.0
    %253 = vmatpush2.msra.mxu0 0.0
    %254 = vmatprep.subr.mxu0 0.0
    %255 = vmatpush2.msra.mxu0 0.0
    %256 = vmatprep.subr.mxu0 0.0
    %257 = vmatpush2.msra.mxu0 0.0
    %258 = vmatprep.subr.mxu0 0.0
    %259 = vmatpush2.msra.mxu0 0.0
    %260 = vmatprep.subr.mxu0 0.0
    %261 = vmatpush2.msra.mxu0 0.0
    %262 = vmatprep.subr.mxu0 0.0
    %263 = vmatpush2.msra.mxu0 0.0
    %264 = vmatprep.subr.mxu0 0.0
    %265 = vmatpush2.msra.mxu0 0.0
    %266 = vmatprep.mubr.f32.mxu0 0.0
    %267 = vmatmul.mubr.f32.gmra.mxu0 %v200
    %v268 = vpop.f32.mrf.mxu0
    %v269 = vadd.f32 0.0, %v268
    %v270 = vpop.f32.mrf.mxu0
    %271 = vdwg.mxu0
    %v272 = vmul.f32 %v181, %v181
    %v273 = vmul.f32 %v186, %v186
    %v274 = vmul.f32 %v191, %v191
    %v275 = vmul.f32 %v196, %v196
    %276 = vmatprep.subr.mxu0 0.0
    %277 = vmatpush1.msra.mxu0 0.0
    %278 = vmatprep.subr.mxu0 0.0
    %279 = vmatpush1.msra.mxu0 0.0
    %280 = vmatprep.subr.mxu0 0.0
    %281 = vmatpush1.msra.mxu0 0.0
    %282 = vmatprep.subr.mxu0 0.0
    %283 = vmatpush1.msra.mxu0 0.0
    %284 = vmatprep.subr.mxu0 0.0
    %285 = vmatpush1.msra.mxu0 0.0
    %286 = vmatprep.subr.mxu0 0.0
    %287 = vmatpush1.msra.mxu0 0.0
    %288 = vmatprep.subr.mxu0 0.0
    %289 = vmatpush1.msra.mxu0 0.0
    %290 = vmatprep.subr.mxu0 0.0
    %291 = vmatpush1.msra.mxu0 0.0
    %292 = vmatprep.subr.mxu0 0.0
    %293 = vmatpush1.msra.mxu0 0.0
    %294 = vmatprep.subr.mxu0 0.0
    %295 = vmatpush1.msra.mxu0 0.0
    %296 = vmatprep.subr.mxu0 0.0
    %297 = vmatpush1.msra.mxu0 0.0
    %298 = vmatprep.subr.mxu0 0.0
    %299 = vmatpush1.msra.mxu0 0.0
    %300 = vmatprep.subr.mxu0 0.0
    %301 = vmatpush1.msra.mxu0 %v275
    %302 = vmatprep.subr.mxu0 0.0
    %303 = vmatpush1.msra.mxu0 %v274
    %304 = vmatprep.subr.mxu0 0.0
    %305 = vmatpush1.msra.mxu0 %v273
    %306 = vmatprep.subr.mxu0 0.0
    %307 = vmatpush1.msra.mxu0 %v272
    %308 = vmatprep.subr.mxu0 0.0
    %309 = vmatpush2.msra.mxu0 0.0
    %310 = vmatprep.subr.mxu0 0.0
    %311 = vmatpush2.msra.mxu0 0.0
    %312 = vmatprep.subr.mxu0 0.0
    %313 = vmatpush2.msra.mxu0 0.0
    %314 = vmatprep.subr.mxu0 0.0
    %315 = vmatpush2.msra.mxu0 0.0
    %316 = vmatprep.subr.mxu0 0.0
    %317 = vmatpush2.msra.mxu0 0.0
    %318 = vmatprep.subr.mxu0 0.0
    %319 = vmatpush2.msra.mxu0 0.0
    %320 = vmatprep.subr.mxu0 0.0
    %321 = vmatpush2.msra.mxu0 0.0
    %322 = vmatprep.subr.mxu0 0.0
    %323 = vmatpush2.msra.mxu0 0.0
    %324 = vmatprep.subr.mxu0 0.0
    %325 = vmatpush2.msra.mxu0 0.0
    %326 = vmatprep.subr.mxu0 0.0
    %327 = vmatpush2.msra.mxu0 0.0
    %328 = vmatprep.subr.mxu0 0.0
    %329 = vmatpush2.msra.mxu0 0.0
    %330 = vmatprep.subr.mxu0 0.0
    %331 = vmatpush2.msra.mxu0 0.0
    %332 = vmatprep.subr.mxu0 0.0
    %333 = vmatpush2.msra.mxu0 0.0
    %334 = vmatprep.subr.mxu0 0.0
    %335 = vmatpush2.msra.mxu0 0.0
    %336 = vmatprep.subr.mxu0 0.0
    %337 = vmatpush2.msra.mxu0 0.0
    %338 = vmatprep.subr.mxu0 0.0
    %339 = vmatpush2.msra.mxu0 0.0
    %340 = vmatprep.mubr.f32.mxu0 0.0
    %341 = vmatmul.mubr.f32.gmra.mxu0 %v200
    %v342 = vpop.f32.mrf.mxu0
    %v343 = vadd.f32 0.0, %v342
    %v344 = vpop.f32.mrf.mxu0
    %345 = vdwg.mxu0
    %v346 = vmul.f32 %v269, 0.03125
    %v347 = vmul.f32 %v343, 0.03125
    %v348 = vmul.f32 %v346, %v346
    %v349 = vsub.f32 %v347, %v348
    %v350 = vmax.f32 %v349, 0.0
    %v351 = vld [vmem:[#allocation10] sm:$0x1]
    %v352 = vadd.f32 %v350, 1e-05
    %v353 = vrsqrt.pop %v352
    %v354 = vmul.f32 %v351, %v353
    %v355 = vld [vmem:[#allocation12] sm:$0x1]
    %v356 = vmul.f32 %v346, %v354
    %v357 = vsub.f32 %v355, %v356
    %v358 = vlaneseq
    %v359 = vshrl.u32 %v358, 7
    %v360 = vsub.s32 0, %v359
    %v361 = vrot.slane %v354, %v360
    %v362 = vmul.f32 %v181, %v361
    %v363 = vmul.f32 %v186, %v361
    %v364 = vmul.f32 %v191, %v361
    %v365 = vmul.f32 %v196, %v361
    %v366 = vlaneseq
    %v367 = vshrl.u32 %v366, 7
    %v368 = vsub.s32 0, %v367
    %v369 = vrot.slane %v357, %v368
    %v370 = vadd.f32 %v362, %v369
    %v371 = vadd.f32 %v363, %v369
    %v372 = vadd.f32 %v364, %v369
    %v373 = vadd.f32 %v365, %v369
    %374 = vst.msk [vmem:[#allocation2 + $0x2] sm:$0xff] %vm101, %v370
    %375 = vst.msk [vmem:[#allocation2 + $0xa] sm:$0xff] %vm101, %v371
    %376 = vst.msk [vmem:[#allocation2 + $0x1a] sm:$0xff] %vm101, %v372
    %377 = vst.msk [vmem:[#allocation2 + $0x22] sm:$0xff] %vm101, %v373
    %v378 = vld [vmem:[#allocation2] sm:$0xff]
    %v379 = vld [vmem:[#allocation2 + $0x8] sm:$0xff]
    %v380 = vld [vmem:[#allocation2 + $0x18] sm:$0xff]
    %v381 = vld [vmem:[#allocation2 + $0x20] sm:$0xff]
    %v382 = vld [vmem:[#allocation2 + $0x1] sm:$0xff]
    %v383 = vld [vmem:[#allocation2 + $0x9] sm:$0xff]
    %v384 = vld [vmem:[#allocation2 + $0x19] sm:$0xff]
    %v385 = vld [vmem:[#allocation2 + $0x21] sm:$0xff]
    %v386 = vld [vmem:[#allocation2 + $0x2] sm:$0xff]
    %v387 = vld [vmem:[#allocation2 + $0xa] sm:$0xff]
    %v388 = vld [vmem:[#allocation2 + $0x1a] sm:$0xff]
    %v389 = vld [vmem:[#allocation2 + $0x22] sm:$0xff]
    %v390 = vld [vmem:[#allocation2 + $0x3] sm:$0xff]
    %v391 = vld [vmem:[#allocation2 + $0xb] sm:$0xff]
    %v392 = vld [vmem:[#allocation2 + $0x1b] sm:$0xff]
    %v393 = vld [vmem:[#allocation2 + $0x23] sm:$0xff]
    %v394 = vld [vmem:[#allocation2 + $0x4] sm:$0xff]
    %v395 = vld [vmem:[#allocation2 + $0xc] sm:$0xff]
    %v396 = vld [vmem:[#allocation2 + $0x1c] sm:$0xff]
    %v397 = vld [vmem:[#allocation2 + $0x24] sm:$0xff]
    %402 = vrot.lane.b32.xlu0 %v382, 32
    %v403 = vpop.permute.xlu0 %402
    %404 = vrot.lane.b32.xlu0 %v383, 32
    %v405 = vpop.permute.xlu0 %404
    %406 = vrot.lane.b32.xlu0 %v384, 32
    %v407 = vpop.permute.xlu0 %406
    %408 = vrot.lane.b32.xlu0 %v385, 32
    %v409 = vpop.permute.xlu0 %408
    %418 = vrot.lane.b32.xlu0 %v386, 64
    %v419 = vpop.permute.xlu0 %418
    %420 = vrot.lane.b32.xlu0 %v387, 64
    %v421 = vpop.permute.xlu0 %420
    %422 = vrot.lane.b32.xlu0 %v388, 64
    %v423 = vpop.permute.xlu0 %422
    %424 = vrot.lane.b32.xlu0 %v389, 64
    %v425 = vpop.permute.xlu0 %424
    %434 = vrot.lane.b32.xlu0 %v390, 96
    %v435 = vpop.permute.xlu0 %434
    %436 = vrot.lane.b32.xlu0 %v391, 96
    %v437 = vpop.permute.xlu0 %436
    %438 = vrot.lane.b32.xlu0 %v392, 96
    %v439 = vpop.permute.xlu0 %438
    %440 = vrot.lane.b32.xlu0 %v393, 96
    %v441 = vpop.permute.xlu0 %440
    %v446 = vsel %vm101, %v378, %v403
    %v447 = vsel %vm101, %v379, %v405
    %v448 = vsel %vm101, %v380, %v407
    %v449 = vsel %vm101, %v381, %v409
    %vm450 = vcmask 523264
    %v451 = vsel %vm450, %v446, %v419
    %v452 = vsel %vm450, %v447, %v421
    %v453 = vsel %vm450, %v448, %v423
    %v454 = vsel %vm450, %v449, %v425
    %vm455 = vcmask 785408
    %v456 = vsel %vm455, %v451, %v435
    %v457 = vsel %vm455, %v452, %v437
    %v458 = vsel %vm455, %v453, %v439
    %v459 = vsel %vm455, %v454, %v441
    %v460 = vld [vmem:[#allocation9] sm:$0xff]
    %v461 = vld [vmem:[#allocation9 + $0x8] sm:$0xff]
    %v462 = vld [vmem:[#allocation9 + $0x10] sm:$0xff]
    %v463 = vld [vmem:[#allocation9 + $0x18] sm:$0xff]
    %v464 = vld [vmem:[#allocation9 + $0x20] sm:$0xff]
    %v465 = vld [vmem:[#allocation9 + $0x28] sm:$0xff]
    %v466 = vld [vmem:[#allocation9 + $0x30] sm:$0xff]
    %v467 = vld [vmem:[#allocation9 + $0x38] sm:$0xff]
    %v468 = vld [vmem:[#allocation9 + $0x40] sm:$0xff]
    %v469 = vld [vmem:[#allocation9 + $0x48] sm:$0xff]
    %v470 = vld [vmem:[#allocation9 + $0x50] sm:$0xff]
    %v471 = vld [vmem:[#allocation9 + $0x58] sm:$0xff]
    %v472 = vld [vmem:[#allocation9 + $0x60] sm:$0xff]
    %v473 = vld [vmem:[#allocation9 + $0x68] sm:$0xff]
    %v474 = vld [vmem:[#allocation9 + $0x70] sm:$0xff]
    %v475 = vld [vmem:[#allocation9 + $0x78] sm:$0xff]
    %v476 = vld [vmem:[#allocation9 + $0x80] sm:$0xff]
    %v477 = vld [vmem:[#allocation9 + $0x88] sm:$0xff]
    %v478 = vld [vmem:[#allocation9 + $0x90] sm:$0xff]
    %v479 = vld [vmem:[#allocation9 + $0x98] sm:$0xff]
    %v480 = vld [vmem:[%s3 + $0x1] sm:$0x1]
    %v481 = vlaneseq
    %v482 = vshrl.u32 %v481, 7
    %v483 = vsub.s32 0, %v482
    %v484 = vrot.slane %v480, %v483
    %v486 = vsel %vm101, %v394, 0
    %v489 = vsel %vm101, %v395, 0
    %v492 = vsel %vm101, %v396, 0
    %v495 = vsel %vm101, %v397, 0
    %497 = vmatprep.subr.mxu0 0.0
    %498 = vmatpush1.msra.mxu0 %v475
    %499 = vmatprep.subr.mxu0 0.0
    %500 = vmatpush1.msra.mxu0 %v474
    %501 = vmatprep.subr.mxu0 0.0
    %502 = vmatpush1.msra.mxu0 %v473
    %503 = vmatprep.subr.mxu0 0.0
    %504 = vmatpush1.msra.mxu0 %v472
    %505 = vmatprep.subr.mxu0 0.0
    %506 = vmatpush1.msra.mxu0 %v471
    %507 = vmatprep.subr.mxu0 0.0
    %508 = vmatpush1.msra.mxu0 %v470
    %509 = vmatprep.subr.mxu0 0.0
    %510 = vmatpush1.msra.mxu0 %v469
    %511 = vmatprep.subr.mxu0 0.0
    %512 = vmatpush1.msra.mxu0 %v468
    %513 = vmatprep.subr.mxu0 0.0
    %514 = vmatpush1.msra.mxu0 %v467
    %515 = vmatprep.subr.mxu0 0.0
    %516 = vmatpush1.msra.mxu0 %v466
    %517 = vmatprep.subr.mxu0 0.0
    %518 = vmatpush1.msra.mxu0 %v465
    %519 = vmatprep.subr.mxu0 0.0
    %520 = vmatpush1.msra.mxu0 %v464
    %521 = vmatprep.subr.mxu0 0.0
    %522 = vmatpush1.msra.mxu0 %v463
    %523 = vmatprep.subr.mxu0 0.0
    %524 = vmatpush1.msra.mxu0 %v462
    %525 = vmatprep.subr.mxu0 0.0
    %526 = vmatpush1.msra.mxu0 %v461
    %527 = vmatprep.subr.mxu0 0.0
    %528 = vmatpush1.msra.mxu0 %v460
    %529 = vmatprep.subr.mxu0 0.0
    %530 = vmatpush2.msra.mxu0 0.0
    %531 = vmatprep.subr.mxu0 0.0
    %532 = vmatpush2.msra.mxu0 0.0
    %533 = vmatprep.subr.mxu0 0.0
    %534 = vmatpush2.msra.mxu0 0.0
    %535 = vmatprep.subr.mxu0 0.0
    %536 = vmatpush2.msra.mxu0 0.0
    %537 = vmatprep.subr.mxu0 0.0
    %538 = vmatpush2.msra.mxu0 0.0
    %539 = vmatprep.subr.mxu0 0.0
    %540 = vmatpush2.msra.mxu0 0.0
    %541 = vmatprep.subr.mxu0 0.0
    %542 = vmatpush2.msra.mxu0 0.0
    %543 = vmatprep.subr.mxu0 0.0
    %544 = vmatpush2.msra.mxu0 0.0
    %545 = vmatprep.subr.mxu0 0.0
    %546 = vmatpush2.msra.mxu0 0.0
    %547 = vmatprep.subr.mxu0 0.0
    %548 = vmatpush2.msra.mxu0 0.0
    %549 = vmatprep.subr.mxu0 0.0
    %550 = vmatpush2.msra.mxu0 0.0
    %551 = vmatprep.subr.mxu0 0.0
    %552 = vmatpush2.msra.mxu0 0.0
    %553 = vmatprep.subr.mxu0 0.0
    %554 = vmatpush2.msra.mxu0 %v479
    %555 = vmatprep.subr.mxu0 0.0
    %556 = vmatpush2.msra.mxu0 %v478
    %557 = vmatprep.subr.mxu0 0.0
    %558 = vmatpush2.msra.mxu0 %v477
    %559 = vmatprep.subr.mxu0 0.0
    %560 = vmatpush2.msra.mxu0 %v476
    %561 = vmatprep.mubr.f32.mxu0 %v486
    %562 = vmatmul.mubr.f32.gmra.mxu0 %v456
    %v563 = vpop.f32.mrf.mxu0
    %v564 = vadd.f32 %v484, %v563
    %v565 = vpop.f32.mrf.mxu0
    %566 = vmatprep.mubr.f32.mxu0 %v489
    %567 = vmatmul.mubr.f32.gmra.mxu0 %v457
    %v568 = vpop.f32.mrf.mxu0
    %v569 = vadd.f32 %v484, %v568
    %v570 = vpop.f32.mrf.mxu0
    %571 = vmatprep.mubr.f32.mxu0 %v492
    %572 = vmatmul.mubr.f32.gmra.mxu0 %v458
    %v573 = vpop.f32.mrf.mxu0
    %v574 = vadd.f32 %v484, %v573
    %v575 = vpop.f32.mrf.mxu0
    %576 = vmatprep.mubr.f32.mxu0 %v495
    %577 = vmatmul.mubr.f32.gmra.mxu0 %v459
    %v578 = vpop.f32.mrf.mxu0
    %v579 = vadd.f32 %v484, %v578
    %v580 = vpop.f32.mrf.mxu0
    %581 = vdwg.mxu0
    %v582 = vmax.f32 %v564, 0.0
    %v583 = vmax.f32 %v569, 0.0
    %v584 = vmax.f32 %v574, 0.0
    %v585 = vmax.f32 %v579, 0.0
    %586 = vmatprep.subr.mxu0 0.0
    %587 = vmatpush1.msra.mxu0 0.0
    %588 = vmatprep.subr.mxu0 0.0
    %589 = vmatpush1.msra.mxu0 0.0
    %590 = vmatprep.subr.mxu0 0.0
    %591 = vmatpush1.msra.mxu0 0.0
    %592 = vmatprep.subr.mxu0 0.0
    %593 = vmatpush1.msra.mxu0 0.0
    %594 = vmatprep.subr.mxu0 0.0
    %595 = vmatpush1.msra.mxu0 0.0
    %596 = vmatprep.subr.mxu0 0.0
    %597 = vmatpush1.msra.mxu0 0.0
    %598 = vmatprep.subr.mxu0 0.0
    %599 = vmatpush1.msra.mxu0 0.0
    %600 = vmatprep.subr.mxu0 0.0
    %601 = vmatpush1.msra.mxu0 0.0
    %602 = vmatprep.subr.mxu0 0.0
    %603 = vmatpush1.msra.mxu0 0.0
    %604 = vmatprep.subr.mxu0 0.0
    %605 = vmatpush1.msra.mxu0 0.0
    %606 = vmatprep.subr.mxu0 0.0
    %607 = vmatpush1.msra.mxu0 0.0
    %608 = vmatprep.subr.mxu0 0.0
    %609 = vmatpush1.msra.mxu0 0.0
    %610 = vmatprep.subr.mxu0 0.0
    %611 = vmatpush1.msra.mxu0 %v585
    %612 = vmatprep.subr.mxu0 0.0
    %613 = vmatpush1.msra.mxu0 %v584
    %614 = vmatprep.subr.mxu0 0.0
    %615 = vmatpush1.msra.mxu0 %v583
    %616 = vmatprep.subr.mxu0 0.0
    %617 = vmatpush1.msra.mxu0 %v582
    %618 = vmatprep.subr.mxu0 0.0
    %619 = vmatpush2.msra.mxu0 0.0
    %620 = vmatprep.subr.mxu0 0.0
    %621 = vmatpush2.msra.mxu0 0.0
    %622 = vmatprep.subr.mxu0 0.0
    %623 = vmatpush2.msra.mxu0 0.0
    %624 = vmatprep.subr.mxu0 0.0
    %625 = vmatpush2.msra.mxu0 0.0
    %626 = vmatprep.subr.mxu0 0.0
    %627 = vmatpush2.msra.mxu0 0.0
    %628 = vmatprep.subr.mxu0 0.0
    %629 = vmatpush2.msra.mxu0 0.0
    %630 = vmatprep.subr.mxu0 0.0
    %631 = vmatpush2.msra.mxu0 0.0
    %632 = vmatprep.subr.mxu0 0.0
    %633 = vmatpush2.msra.mxu0 0.0
    %634 = vmatprep.subr.mxu0 0.0
    %635 = vmatpush2.msra.mxu0 0.0
    %636 = vmatprep.subr.mxu0 0.0
    %637 = vmatpush2.msra.mxu0 0.0
    %638 = vmatprep.subr.mxu0 0.0
    %639 = vmatpush2.msra.mxu0 0.0
    %640 = vmatprep.subr.mxu0 0.0
    %641 = vmatpush2.msra.mxu0 0.0
    %642 = vmatprep.subr.mxu0 0.0
    %643 = vmatpush2.msra.mxu0 0.0
    %644 = vmatprep.subr.mxu0 0.0
    %645 = vmatpush2.msra.mxu0 0.0
    %646 = vmatprep.subr.mxu0 0.0
    %647 = vmatpush2.msra.mxu0 0.0
    %648 = vmatprep.subr.mxu0 0.0
    %649 = vmatpush2.msra.mxu0 0.0
    %650 = vmatprep.mubr.f32.mxu0 0.0
    %651 = vmatmul.mubr.f32.gmra.mxu0 %v200
    %v652 = vpop.f32.mrf.mxu0
    %v653 = vadd.f32 0.0, %v652
    %v654 = vpop.f32.mrf.mxu0
    %655 = vdwg.mxu0
    %v656 = vmul.f32 %v582, %v582
    %v657 = vmul.f32 %v583, %v583
    %v658 = vmul.f32 %v584, %v584
    %v659 = vmul.f32 %v585, %v585
    %660 = vmatprep.subr.mxu0 0.0
    %661 = vmatpush1.msra.mxu0 0.0
    %662 = vmatprep.subr.mxu0 0.0
    %663 = vmatpush1.msra.mxu0 0.0
    %664 = vmatprep.subr.mxu0 0.0
    %665 = vmatpush1.msra.mxu0 0.0
    %666 = vmatprep.subr.mxu0 0.0
    %667 = vmatpush1.msra.mxu0 0.0
    %668 = vmatprep.subr.mxu0 0.0
    %669 = vmatpush1.msra.mxu0 0.0
    %670 = vmatprep.subr.mxu0 0.0
    %671 = vmatpush1.msra.mxu0 0.0
    %672 = vmatprep.subr.mxu0 0.0
    %673 = vmatpush1.msra.mxu0 0.0
    %674 = vmatprep.subr.mxu0 0.0
    %675 = vmatpush1.msra.mxu0 0.0
    %676 = vmatprep.subr.mxu0 0.0
    %677 = vmatpush1.msra.mxu0 0.0
    %678 = vmatprep.subr.mxu0 0.0
    %679 = vmatpush1.msra.mxu0 0.0
    %680 = vmatprep.subr.mxu0 0.0
    %681 = vmatpush1.msra.mxu0 0.0
    %682 = vmatprep.subr.mxu0 0.0
    %683 = vmatpush1.msra.mxu0 0.0
    %684 = vmatprep.subr.mxu0 0.0
    %685 = vmatpush1.msra.mxu0 %v659
    %686 = vmatprep.subr.mxu0 0.0
    %687 = vmatpush1.msra.mxu0 %v658
    %688 = vmatprep.subr.mxu0 0.0
    %689 = vmatpush1.msra.mxu0 %v657
    %690 = vmatprep.subr.mxu0 0.0
    %691 = vmatpush1.msra.mxu0 %v656
    %692 = vmatprep.subr.mxu0 0.0
    %693 = vmatpush2.msra.mxu0 0.0
    %694 = vmatprep.subr.mxu0 0.0
    %695 = vmatpush2.msra.mxu0 0.0
    %696 = vmatprep.subr.mxu0 0.0
    %697 = vmatpush2.msra.mxu0 0.0
    %698 = vmatprep.subr.mxu0 0.0
    %699 = vmatpush2.msra.mxu0 0.0
    %700 = vmatprep.subr.mxu0 0.0
    %701 = vmatpush2.msra.mxu0 0.0
    %702 = vmatprep.subr.mxu0 0.0
    %703 = vmatpush2.msra.mxu0 0.0
    %704 = vmatprep.subr.mxu0 0.0
    %705 = vmatpush2.msra.mxu0 0.0
    %706 = vmatprep.subr.mxu0 0.0
    %707 = vmatpush2.msra.mxu0 0.0
    %708 = vmatprep.subr.mxu0 0.0
    %709 = vmatpush2.msra.mxu0 0.0
    %710 = vmatprep.subr.mxu0 0.0
    %711 = vmatpush2.msra.mxu0 0.0
    %712 = vmatprep.subr.mxu0 0.0
    %713 = vmatpush2.msra.mxu0 0.0
    %714 = vmatprep.subr.mxu0 0.0
    %715 = vmatpush2.msra.mxu0 0.0
    %716 = vmatprep.subr.mxu0 0.0
    %717 = vmatpush2.msra.mxu0 0.0
    %718 = vmatprep.subr.mxu0 0.0
    %719 = vmatpush2.msra.mxu0 0.0
    %720 = vmatprep.subr.mxu0 0.0
    %721 = vmatpush2.msra.mxu0 0.0
    %722 = vmatprep.subr.mxu0 0.0
    %723 = vmatpush2.msra.mxu0 0.0
    %724 = vmatprep.mubr.f32.mxu0 0.0
    %725 = vmatmul.mubr.f32.gmra.mxu0 %v200
    %v726 = vpop.f32.mrf.mxu0
    %v727 = vadd.f32 0.0, %v726
    %v728 = vpop.f32.mrf.mxu0
    %729 = vdwg.mxu0
    %v730 = vmul.f32 %v653, 0.03125
    %v731 = vmul.f32 %v727, 0.03125
    %v732 = vmul.f32 %v730, %v730
    %v733 = vsub.f32 %v731, %v732
    %v734 = vmax.f32 %v733, 0.0
    %v735 = vld [vmem:[#allocation10 + $0x1] sm:$0x1]
    %v736 = vadd.f32 %v734, 1e-05
    %v737 = vrsqrt.pop %v736
    %v738 = vmul.f32 %v735, %v737
    %v739 = vld [vmem:[#allocation12 + $0x1] sm:$0x1]
    %v740 = vmul.f32 %v730, %v738
    %v741 = vsub.f32 %v739, %v740
    %v742 = vlaneseq
    %v743 = vshrl.u32 %v742, 7
    %v744 = vsub.s32 0, %v743
    %v745 = vrot.slane %v738, %v744
    %v746 = vmul.f32 %v582, %v745
    %v747 = vmul.f32 %v583, %v745
    %v748 = vmul.f32 %v584, %v745
    %v749 = vmul.f32 %v585, %v745
    %v750 = vlaneseq
    %v751 = vshrl.u32 %v750, 7
    %v752 = vsub.s32 0, %v751
    %v753 = vrot.slane %v741, %v752
    %v754 = vadd.f32 %v746, %v753
    %v755 = vadd.f32 %v747, %v753
    %v756 = vadd.f32 %v748, %v753
    %v757 = vadd.f32 %v749, %v753
    %758 = vst.msk [vmem:[#allocation2 + $0x2] sm:$0xff] %vm101, %v754
    %759 = vst.msk [vmem:[#allocation2 + $0xa] sm:$0xff] %vm101, %v755
    %760 = vst.msk [vmem:[#allocation2 + $0x1a] sm:$0xff] %vm101, %v756
    %761 = vst.msk [vmem:[#allocation2 + $0x22] sm:$0xff] %vm101, %v757
    %v762 = vld [vmem:[#allocation2] sm:$0xff]
    %v763 = vld [vmem:[#allocation2 + $0x8] sm:$0xff]
    %v764 = vld [vmem:[#allocation2 + $0x18] sm:$0xff]
    %v765 = vld [vmem:[#allocation2 + $0x20] sm:$0xff]
    %v766 = vld [vmem:[#allocation2 + $0x1] sm:$0xff]
    %v767 = vld [vmem:[#allocation2 + $0x9] sm:$0xff]
    %v768 = vld [vmem:[#allocation2 + $0x19] sm:$0xff]
    %v769 = vld [vmem:[#allocation2 + $0x21] sm:$0xff]
    %v770 = vld [vmem:[#allocation2 + $0x2] sm:$0xff]
    %v771 = vld [vmem:[#allocation2 + $0xa] sm:$0xff]
    %v772 = vld [vmem:[#allocation2 + $0x1a] sm:$0xff]
    %v773 = vld [vmem:[#allocation2 + $0x22] sm:$0xff]
    %v774 = vld [vmem:[#allocation2 + $0x3] sm:$0xff]
    %v775 = vld [vmem:[#allocation2 + $0xb] sm:$0xff]
    %v776 = vld [vmem:[#allocation2 + $0x1b] sm:$0xff]
    %v777 = vld [vmem:[#allocation2 + $0x23] sm:$0xff]
    %v778 = vld [vmem:[#allocation2 + $0x4] sm:$0xff]
    %v779 = vld [vmem:[#allocation2 + $0xc] sm:$0xff]
    %v780 = vld [vmem:[#allocation2 + $0x1c] sm:$0xff]
    %v781 = vld [vmem:[#allocation2 + $0x24] sm:$0xff]
    %786 = vrot.lane.b32.xlu0 %v766, 32
    %v787 = vpop.permute.xlu0 %786
    %788 = vrot.lane.b32.xlu0 %v767, 32
    %v789 = vpop.permute.xlu0 %788
    %790 = vrot.lane.b32.xlu0 %v768, 32
    %v791 = vpop.permute.xlu0 %790
    %792 = vrot.lane.b32.xlu0 %v769, 32
    %v793 = vpop.permute.xlu0 %792
    %802 = vrot.lane.b32.xlu0 %v770, 64
    %v803 = vpop.permute.xlu0 %802
    %804 = vrot.lane.b32.xlu0 %v771, 64
    %v805 = vpop.permute.xlu0 %804
    %806 = vrot.lane.b32.xlu0 %v772, 64
    %v807 = vpop.permute.xlu0 %806
    %808 = vrot.lane.b32.xlu0 %v773, 64
    %v809 = vpop.permute.xlu0 %808
    %818 = vrot.lane.b32.xlu0 %v774, 96
    %v819 = vpop.permute.xlu0 %818
    %820 = vrot.lane.b32.xlu0 %v775, 96
    %v821 = vpop.permute.xlu0 %820
    %822 = vrot.lane.b32.xlu0 %v776, 96
    %v823 = vpop.permute.xlu0 %822
    %824 = vrot.lane.b32.xlu0 %v777, 96
    %v825 = vpop.permute.xlu0 %824
    %v830 = vsel %vm101, %v762, %v787
    %v831 = vsel %vm101, %v763, %v789
    %v832 = vsel %vm101, %v764, %v791
    %v833 = vsel %vm101, %v765, %v793
    %v834 = vsel %vm450, %v830, %v803
    %v835 = vsel %vm450, %v831, %v805
    %v836 = vsel %vm450, %v832, %v807
    %v837 = vsel %vm450, %v833, %v809
    %v838 = vsel %vm455, %v834, %v819
    %v839 = vsel %vm455, %v835, %v821
    %v840 = vsel %vm455, %v836, %v823
    %v841 = vsel %vm455, %v837, %v825
    %s842 = scalar_lea.vmem [#allocation9], 160
    %v843 = vld [vmem:[%s842] sm:$0xff]
    %v844 = vld [vmem:[%s842 + $0x8] sm:$0xff]
    %v845 = vld [vmem:[%s842 + $0x10] sm:$0xff]
    %v846 = vld [vmem:[%s842 + $0x18] sm:$0xff]
    %v847 = vld [vmem:[%s842 + $0x20] sm:$0xff]
    %v848 = vld [vmem:[%s842 + $0x28] sm:$0xff]
    %v849 = vld [vmem:[%s842 + $0x30] sm:$0xff]
    %v850 = vld [vmem:[%s842 + $0x38] sm:$0xff]
    %v851 = vld [vmem:[%s842 + $0x40] sm:$0xff]
    %v852 = vld [vmem:[%s842 + $0x48] sm:$0xff]
    %v853 = vld [vmem:[%s842 + $0x50] sm:$0xff]
    %v854 = vld [vmem:[%s842 + $0x58] sm:$0xff]
    %v855 = vld [vmem:[%s842 + $0x60] sm:$0xff]
    %v856 = vld [vmem:[%s842 + $0x68] sm:$0xff]
    %v857 = vld [vmem:[%s842 + $0x70] sm:$0xff]
    %v858 = vld [vmem:[%s842 + $0x78] sm:$0xff]
    %v859 = vld [vmem:[%s842 + $0x80] sm:$0xff]
    %v860 = vld [vmem:[%s842 + $0x88] sm:$0xff]
    %v861 = vld [vmem:[%s842 + $0x90] sm:$0xff]
    %v862 = vld [vmem:[%s842 + $0x98] sm:$0xff]
    %v863 = vld [vmem:[%s3 + $0x2] sm:$0x1]
    %v864 = vlaneseq
    %v865 = vshrl.u32 %v864, 7
    %v866 = vsub.s32 0, %v865
    %v867 = vrot.slane %v863, %v866
    %v869 = vsel %vm101, %v778, 0
    %v872 = vsel %vm101, %v779, 0
    %v875 = vsel %vm101, %v780, 0
    %v878 = vsel %vm101, %v781, 0
    %880 = vmatprep.subr.mxu0 0.0
    %881 = vmatpush1.msra.mxu0 %v858
    %882 = vmatprep.subr.mxu0 0.0
    %883 = vmatpush1.msra.mxu0 %v857
    %884 = vmatprep.subr.mxu0 0.0
    %885 = vmatpush1.msra.mxu0 %v856
    %886 = vmatprep.subr.mxu0 0.0
    %887 = vmatpush1.msra.mxu0 %v855
    %888 = vmatprep.subr.mxu0 0.0
    %889 = vmatpush1.msra.mxu0 %v854
    %890 = vmatprep.subr.mxu0 0.0
    %891 = vmatpush1.msra.mxu0 %v853
    %892 = vmatprep.subr.mxu0 0.0
    %893 = vmatpush1.msra.mxu0 %v852
    %894 = vmatprep.subr.mxu0 0.0
    %895 = vmatpush1.msra.mxu0 %v851
    %896 = vmatprep.subr.mxu0 0.0
    %897 = vmatpush1.msra.mxu0 %v850
    %898 = vmatprep.subr.mxu0 0.0
    %899 = vmatpush1.msra.mxu0 %v849
    %900 = vmatprep.subr.mxu0 0.0
    %901 = vmatpush1.msra.mxu0 %v848
    %902 = vmatprep.subr.mxu0 0.0
    %903 = vmatpush1.msra.mxu0 %v847
    %904 = vmatprep.subr.mxu0 0.0
    %905 = vmatpush1.msra.mxu0 %v846
    %906 = vmatprep.subr.mxu0 0.0
    %907 = vmatpush1.msra.mxu0 %v845
    %908 = vmatprep.subr.mxu0 0.0
    %909 = vmatpush1.msra.mxu0 %v844
    %910 = vmatprep.subr.mxu0 0.0
    %911 = vmatpush1.msra.mxu0 %v843
    %912 = vmatprep.subr.mxu0 0.0
    %913 = vmatpush2.msra.mxu0 0.0
    %914 = vmatprep.subr.mxu0 0.0
    %915 = vmatpush2.msra.mxu0 0.0
    %916 = vmatprep.subr.mxu0 0.0
    %917 = vmatpush2.msra.mxu0 0.0
    %918 = vmatprep.subr.mxu0 0.0
    %919 = vmatpush2.msra.mxu0 0.0
    %920 = vmatprep.subr.mxu0 0.0
    %921 = vmatpush2.msra.mxu0 0.0
    %922 = vmatprep.subr.mxu0 0.0
    %923 = vmatpush2.msra.mxu0 0.0
    %924 = vmatprep.subr.mxu0 0.0
    %925 = vmatpush2.msra.mxu0 0.0
    %926 = vmatprep.subr.mxu0 0.0
    %927 = vmatpush2.msra.mxu0 0.0
    %928 = vmatprep.subr.mxu0 0.0
    %929 = vmatpush2.msra.mxu0 0.0
    %930 = vmatprep.subr.mxu0 0.0
    %931 = vmatpush2.msra.mxu0 0.0
    %932 = vmatprep.subr.mxu0 0.0
    %933 = vmatpush2.msra.mxu0 0.0
    %934 = vmatprep.subr.mxu0 0.0
    %935 = vmatpush2.msra.mxu0 0.0
    %936 = vmatprep.subr.mxu0 0.0
    %937 = vmatpush2.msra.mxu0 %v862
    %938 = vmatprep.subr.mxu0 0.0
    %939 = vmatpush2.msra.mxu0 %v861
    %940 = vmatprep.subr.mxu0 0.0
    %941 = vmatpush2.msra.mxu0 %v860
    %942 = vmatprep.subr.mxu0 0.0
    %943 = vmatpush2.msra.mxu0 %v859
    %944 = vmatprep.mubr.f32.mxu0 %v869
    %945 = vmatmul.mubr.f32.gmra.mxu0 %v838
    %v946 = vpop.f32.mrf.mxu0
    %v947 = vadd.f32 %v867, %v946
    %v948 = vpop.f32.mrf.mxu0
    %949 = vmatprep.mubr.f32.mxu0 %v872
    %950 = vmatmul.mubr.f32.gmra.mxu0 %v839
    %v951 = vpop.f32.mrf.mxu0
    %v952 = vadd.f32 %v867, %v951
    %v953 = vpop.f32.mrf.mxu0
    %954 = vmatprep.mubr.f32.mxu0 %v875
    %955 = vmatmul.mubr.f32.gmra.mxu0 %v840
    %v956 = vpop.f32.mrf.mxu0
    %v957 = vadd.f32 %v867, %v956
    %v958 = vpop.f32.mrf.mxu0
    %959 = vmatprep.mubr.f32.mxu0 %v878
    %960 = vmatmul.mubr.f32.gmra.mxu0 %v841
    %v961 = vpop.f32.mrf.mxu0
    %v962 = vadd.f32 %v867, %v961
    %v963 = vpop.f32.mrf.mxu0
    %964 = vdwg.mxu0
    %v965 = vmax.f32 %v947, 0.0
    %v966 = vmax.f32 %v952, 0.0
    %v967 = vmax.f32 %v957, 0.0
    %v968 = vmax.f32 %v962, 0.0
    %969 = vmatprep.subr.mxu0 0.0
    %970 = vmatpush1.msra.mxu0 0.0
    %971 = vmatprep.subr.mxu0 0.0
    %972 = vmatpush1.msra.mxu0 0.0
    %973 = vmatprep.subr.mxu0 0.0
    %974 = vmatpush1.msra.mxu0 0.0
    %975 = vmatprep.subr.mxu0 0.0
    %976 = vmatpush1.msra.mxu0 0.0
    %977 = vmatprep.subr.mxu0 0.0
    %978 = vmatpush1.msra.mxu0 0.0
    %979 = vmatprep.subr.mxu0 0.0
    %980 = vmatpush1.msra.mxu0 0.0
    %981 = vmatprep.subr.mxu0 0.0
    %982 = vmatpush1.msra.mxu0 0.0
    %983 = vmatprep.subr.mxu0 0.0
    %984 = vmatpush1.msra.mxu0 0.0
    %985 = vmatprep.subr.mxu0 0.0
    %986 = vmatpush1.msra.mxu0 0.0
    %987 = vmatprep.subr.mxu0 0.0
    %988 = vmatpush1.msra.mxu0 0.0
    %989 = vmatprep.subr.mxu0 0.0
    %990 = vmatpush1.msra.mxu0 0.0
    %991 = vmatprep.subr.mxu0 0.0
    %992 = vmatpush1.msra.mxu0 0.0
    %993 = vmatprep.subr.mxu0 0.0
    %994 = vmatpush1.msra.mxu0 %v968
    %995 = vmatprep.subr.mxu0 0.0
    %996 = vmatpush1.msra.mxu0 %v967
    %997 = vmatprep.subr.mxu0 0.0
    %998 = vmatpush1.msra.mxu0 %v966
    %999 = vmatprep.subr.mxu0 0.0
    %1000 = vmatpush1.msra.mxu0 %v965
    %1001 = vmatprep.subr.mxu0 0.0
    %1002 = vmatpush2.msra.mxu0 0.0
    %1003 = vmatprep.subr.mxu0 0.0
    %1004 = vmatpush2.msra.mxu0 0.0
    %1005 = vmatprep.subr.mxu0 0.0
    %1006 = vmatpush2.msra.mxu0 0.0
    %1007 = vmatprep.subr.mxu0 0.0
    %1008 = vmatpush2.msra.mxu0 0.0
    %1009 = vmatprep.subr.mxu0 0.0
    %1010 = vmatpush2.msra.mxu0 0.0
    %1011 = vmatprep.subr.mxu0 0.0
    %1012 = vmatpush2.msra.mxu0 0.0
    %1013 = vmatprep.subr.mxu0 0.0
    %1014 = vmatpush2.msra.mxu0 0.0
    %1015 = vmatprep.subr.mxu0 0.0
    %1016 = vmatpush2.msra.mxu0 0.0
    %1017 = vmatprep.subr.mxu0 0.0
    %1018 = vmatpush2.msra.mxu0 0.0
    %1019 = vmatprep.subr.mxu0 0.0
    %1020 = vmatpush2.msra.mxu0 0.0
    %1021 = vmatprep.subr.mxu0 0.0
    %1022 = vmatpush2.msra.mxu0 0.0
    %1023 = vmatprep.subr.mxu0 0.0
    %1024 = vmatpush2.msra.mxu0 0.0
    %1025 = vmatprep.subr.mxu0 0.0
    %1026 = vmatpush2.msra.mxu0 0.0
    %1027 = vmatprep.subr.mxu0 0.0
    %1028 = vmatpush2.msra.mxu0 0.0
    %1029 = vmatprep.subr.mxu0 0.0
    %1030 = vmatpush2.msra.mxu0 0.0
    %1031 = vmatprep.subr.mxu0 0.0
    %1032 = vmatpush2.msra.mxu0 0.0
    %1033 = vmatprep.mubr.f32.mxu0 0.0
    %1034 = vmatmul.mubr.f32.gmra.mxu0 %v200
    %v1035 = vpop.f32.mrf.mxu0
    %v1036 = vadd.f32 0.0, %v1035
    %v1037 = vpop.f32.mrf.mxu0
    %1038 = vdwg.mxu0
    %v1039 = vmul.f32 %v965, %v965
    %v1040 = vmul.f32 %v966, %v966
    %v1041 = vmul.f32 %v967, %v967
    %v1042 = vmul.f32 %v968, %v968
    %1043 = vmatprep.subr.mxu0 0.0
    %1044 = vmatpush1.msra.mxu0 0.0
    %1045 = vmatprep.subr.mxu0 0.0
    %1046 = vmatpush1.msra.mxu0 0.0
    %1047 = vmatprep.subr.mxu0 0.0
    %1048 = vmatpush1.msra.mxu0 0.0
    %1049 = vmatprep.subr.mxu0 0.0
    %1050 = vmatpush1.msra.mxu0 0.0
    %1051 = vmatprep.subr.mxu0 0.0
    %1052 = vmatpush1.msra.mxu0 0.0
    %1053 = vmatprep.subr.mxu0 0.0
    %1054 = vmatpush1.msra.mxu0 0.0
    %1055 = vmatprep.subr.mxu0 0.0
    %1056 = vmatpush1.msra.mxu0 0.0
    %1057 = vmatprep.subr.mxu0 0.0
    %1058 = vmatpush1.msra.mxu0 0.0
    %1059 = vmatprep.subr.mxu0 0.0
    %1060 = vmatpush1.msra.mxu0 0.0
    %1061 = vmatprep.subr.mxu0 0.0
    %1062 = vmatpush1.msra.mxu0 0.0
    %1063 = vmatprep.subr.mxu0 0.0
    %1064 = vmatpush1.msra.mxu0 0.0
    %1065 = vmatprep.subr.mxu0 0.0
    %1066 = vmatpush1.msra.mxu0 0.0
    %1067 = vmatprep.subr.mxu0 0.0
    %1068 = vmatpush1.msra.mxu0 %v1042
    %1069 = vmatprep.subr.mxu0 0.0
    %1070 = vmatpush1.msra.mxu0 %v1041
    %1071 = vmatprep.subr.mxu0 0.0
    %1072 = vmatpush1.msra.mxu0 %v1040
    %1073 = vmatprep.subr.mxu0 0.0
    %1074 = vmatpush1.msra.mxu0 %v1039
    %1075 = vmatprep.subr.mxu0 0.0
    %1076 = vmatpush2.msra.mxu0 0.0
    %1077 = vmatprep.subr.mxu0 0.0
    %1078 = vmatpush2.msra.mxu0 0.0
    %1079 = vmatprep.subr.mxu0 0.0
    %1080 = vmatpush2.msra.mxu0 0.0
    %1081 = vmatprep.subr.mxu0 0.0
    %1082 = vmatpush2.msra.mxu0 0.0
    %1083 = vmatprep.subr.mxu0 0.0
    %1084 = vmatpush2.msra.mxu0 0.0
    %1085 = vmatprep.subr.mxu0 0.0
    %1086 = vmatpush2.msra.mxu0 0.0
    %1087 = vmatprep.subr.mxu0 0.0
    %1088 = vmatpush2.msra.mxu0 0.0
    %1089 = vmatprep.subr.mxu0 0.0
    %1090 = vmatpush2.msra.mxu0 0.0
    %1091 = vmatprep.subr.mxu0 0.0
    %1092 = vmatpush2.msra.mxu0 0.0
    %1093 = vmatprep.subr.mxu0 0.0
    %1094 = vmatpush2.msra.mxu0 0.0
    %1095 = vmatprep.subr.mxu0 0.0
    %1096 = vmatpush2.msra.mxu0 0.0
    %1097 = vmatprep.subr.mxu0 0.0
    %1098 = vmatpush2.msra.mxu0 0.0
    %1099 = vmatprep.subr.mxu0 0.0
    %1100 = vmatpush2.msra.mxu0 0.0
    %1101 = vmatprep.subr.mxu0 0.0
    %1102 = vmatpush2.msra.mxu0 0.0
    %1103 = vmatprep.subr.mxu0 0.0
    %1104 = vmatpush2.msra.mxu0 0.0
    %1105 = vmatprep.subr.mxu0 0.0
    %1106 = vmatpush2.msra.mxu0 0.0
    %1107 = vmatprep.mubr.f32.mxu0 0.0
    %1108 = vmatmul.mubr.f32.gmra.mxu0 %v200
    %v1109 = vpop.f32.mrf.mxu0
    %v1110 = vadd.f32 0.0, %v1109
    %v1111 = vpop.f32.mrf.mxu0
    %1112 = vdwg.mxu0
    %v1113 = vmul.f32 %v1036, 0.03125
    %v1114 = vmul.f32 %v1110, 0.03125
    %v1115 = vmul.f32 %v1113, %v1113
    %v1116 = vsub.f32 %v1114, %v1115
    %v1117 = vmax.f32 %v1116, 0.0
    %v1118 = vld [vmem:[#allocation10 + $0x2] sm:$0x1]
    %v1119 = vadd.f32 %v1117, 1e-05
    %v1120 = vrsqrt.pop %v1119
    %v1121 = vmul.f32 %v1118, %v1120
    %v1122 = vld [vmem:[#allocation12 + $0x2] sm:$0x1]
    %v1123 = vmul.f32 %v1113, %v1121
    %v1124 = vsub.f32 %v1122, %v1123
    %v1125 = vlaneseq
    %v1126 = vshrl.u32 %v1125, 7
    %v1127 = vsub.s32 0, %v1126
    %v1128 = vrot.slane %v1121, %v1127
    %v1129 = vmul.f32 %v965, %v1128
    %v1130 = vmul.f32 %v966, %v1128
    %v1131 = vmul.f32 %v967, %v1128
    %v1132 = vmul.f32 %v968, %v1128
    %v1133 = vlaneseq
    %v1134 = vshrl.u32 %v1133, 7
    %v1135 = vsub.s32 0, %v1134
    %v1136 = vrot.slane %v1124, %v1135
    %v1137 = vadd.f32 %v1129, %v1136
    %v1138 = vadd.f32 %v1130, %v1136
    %v1139 = vadd.f32 %v1131, %v1136
    %v1140 = vadd.f32 %v1132, %v1136
    %v1141 = vadd.f32 %v1137, %v370
    %v1142 = vadd.f32 %v1138, %v371
    %v1143 = vadd.f32 %v1139, %v372
    %v1144 = vadd.f32 %v1140, %v373
    %1145 = vst.msk [vmem:[#allocation2 + $0x2] sm:$0xff] %vm101, %v1141
    %1146 = vst.msk [vmem:[#allocation2 + $0xa] sm:$0xff] %vm101, %v1142
    %1147 = vst.msk [vmem:[#allocation2 + $0x1a] sm:$0xff] %vm101, %v1143
    %1148 = vst.msk [vmem:[#allocation2 + $0x22] sm:$0xff] %vm101, %v1144
    %v1149 = vld [vmem:[#allocation2] sm:$0xff]
    %v1150 = vld [vmem:[#allocation2 + $0x8] sm:$0xff]
    %v1151 = vld [vmem:[#allocation2 + $0x18] sm:$0xff]
    %v1152 = vld [vmem:[#allocation2 + $0x20] sm:$0xff]
    %v1153 = vld [vmem:[#allocation2 + $0x1] sm:$0xff]
    %v1154 = vld [vmem:[#allocation2 + $0x9] sm:$0xff]
    %v1155 = vld [vmem:[#allocation2 + $0x19] sm:$0xff]
    %v1156 = vld [vmem:[#allocation2 + $0x21] sm:$0xff]
    %v1157 = vld [vmem:[#allocation2 + $0x2] sm:$0xff]
    %v1158 = vld [vmem:[#allocation2 + $0xa] sm:$0xff]
    %v1159 = vld [vmem:[#allocation2 + $0x1a] sm:$0xff]
    %v1160 = vld [vmem:[#allocation2 + $0x22] sm:$0xff]
    %v1161 = vld [vmem:[#allocation2 + $0x3] sm:$0xff]
    %v1162 = vld [vmem:[#allocation2 + $0xb] sm:$0xff]
    %v1163 = vld [vmem:[#allocation2 + $0x1b] sm:$0xff]
    %v1164 = vld [vmem:[#allocation2 + $0x23] sm:$0xff]
    %v1165 = vld [vmem:[#allocation2 + $0x4] sm:$0xff]
    %v1166 = vld [vmem:[#allocation2 + $0xc] sm:$0xff]
    %v1167 = vld [vmem:[#allocation2 + $0x1c] sm:$0xff]
    %v1168 = vld [vmem:[#allocation2 + $0x24] sm:$0xff]
    %1173 = vrot.lane.b32.xlu0 %v1153, 32
    %v1174 = vpop.permute.xlu0 %1173
    %1175 = vrot.lane.b32.xlu0 %v1154, 32
    %v1176 = vpop.permute.xlu0 %1175
    %1177 = vrot.lane.b32.xlu0 %v1155, 32
    %v1178 = vpop.permute.xlu0 %1177
    %1179 = vrot.lane.b32.xlu0 %v1156, 32
    %v1180 = vpop.permute.xlu0 %1179
    %1189 = vrot.lane.b32.xlu0 %v1157, 64
    %v1190 = vpop.permute.xlu0 %1189
    %1191 = vrot.lane.b32.xlu0 %v1158, 64
    %v1192 = vpop.permute.xlu0 %1191
    %1193 = vrot.lane.b32.xlu0 %v1159, 64
    %v1194 = vpop.permute.xlu0 %1193
    %1195 = vrot.lane.b32.xlu0 %v1160, 64
    %v1196 = vpop.permute.xlu0 %1195
    %1205 = vrot.lane.b32.xlu0 %v1161, 96
    %v1206 = vpop.permute.xlu0 %1205
    %1207 = vrot.lane.b32.xlu0 %v1162, 96
    %v1208 = vpop.permute.xlu0 %1207
    %1209 = vrot.lane.b32.xlu0 %v1163, 96
    %v1210 = vpop.permute.xlu0 %1209
    %1211 = vrot.lane.b32.xlu0 %v1164, 96
    %v1212 = vpop.permute.xlu0 %1211
    %v1217 = vsel %vm101, %v1149, %v1174
    %v1218 = vsel %vm101, %v1150, %v1176
    %v1219 = vsel %vm101, %v1151, %v1178
    %v1220 = vsel %vm101, %v1152, %v1180
    %v1221 = vsel %vm450, %v1217, %v1190
    %v1222 = vsel %vm450, %v1218, %v1192
    %v1223 = vsel %vm450, %v1219, %v1194
    %v1224 = vsel %vm450, %v1220, %v1196
    %v1225 = vsel %vm455, %v1221, %v1206
    %v1226 = vsel %vm455, %v1222, %v1208
    %v1227 = vsel %vm455, %v1223, %v1210
    %v1228 = vsel %vm455, %v1224, %v1212
    %s1229 = scalar_lea.vmem [#allocation9], 320
    %v1230 = vld [vmem:[%s1229] sm:$0xff]
    %v1231 = vld [vmem:[%s1229 + $0x8] sm:$0xff]
    %v1232 = vld [vmem:[%s1229 + $0x10] sm:$0xff]
    %v1233 = vld [vmem:[%s1229 + $0x18] sm:$0xff]
    %v1234 = vld [vmem:[%s1229 + $0x20] sm:$0xff]
    %v1235 = vld [vmem:[%s1229 + $0x28] sm:$0xff]
    %v1236 = vld [vmem:[%s1229 + $0x30] sm:$0xff]
    %v1237 = vld [vmem:[%s1229 + $0x38] sm:$0xff]
    %v1238 = vld [vmem:[%s1229 + $0x40] sm:$0xff]
    %v1239 = vld [vmem:[%s1229 + $0x48] sm:$0xff]
    %v1240 = vld [vmem:[%s1229 + $0x50] sm:$0xff]
    %v1241 = vld [vmem:[%s1229 + $0x58] sm:$0xff]
    %v1242 = vld [vmem:[%s1229 + $0x60] sm:$0xff]
    %v1243 = vld [vmem:[%s1229 + $0x68] sm:$0xff]
    %v1244 = vld [vmem:[%s1229 + $0x70] sm:$0xff]
    %v1245 = vld [vmem:[%s1229 + $0x78] sm:$0xff]
    %v1246 = vld [vmem:[%s1229 + $0x80] sm:$0xff]
    %v1247 = vld [vmem:[%s1229 + $0x88] sm:$0xff]
    %v1248 = vld [vmem:[%s1229 + $0x90] sm:$0xff]
    %v1249 = vld [vmem:[%s1229 + $0x98] sm:$0xff]
    %v1250 = vld [vmem:[%s3 + $0x3] sm:$0x1]
    %v1251 = vlaneseq
    %v1252 = vshrl.u32 %v1251, 7
    %v1253 = vsub.s32 0, %v1252
    %v1254 = vrot.slane %v1250, %v1253
    %v1256 = vsel %vm101, %v1165, 0
    %v1259 = vsel %vm101, %v1166, 0
    %v1262 = vsel %vm101, %v1167, 0
    %v1265 = vsel %vm101, %v1168, 0
    %1267 = vmatprep.subr.mxu0 0.0
    %1268 = vmatpush1.msra.mxu0 %v1245
    %1269 = vmatprep.subr.mxu0 0.0
    %1270 = vmatpush1.msra.mxu0 %v1244
    %1271 = vmatprep.subr.mxu0 0.0
    %1272 = vmatpush1.msra.mxu0 %v1243
    %1273 = vmatprep.subr.mxu0 0.0
    %1274 = vmatpush1.msra.mxu0 %v1242
    %1275 = vmatprep.subr.mxu0 0.0
    %1276 = vmatpush1.msra.mxu0 %v1241
    %1277 = vmatprep.subr.mxu0 0.0
    %1278 = vmatpush1.msra.mxu0 %v1240
    %1279 = vmatprep.subr.mxu0 0.0
    %1280 = vmatpush1.msra.mxu0 %v1239
    %1281 = vmatprep.subr.mxu0 0.0
    %1282 = vmatpush1.msra.mxu0 %v1238
    %1283 = vmatprep.subr.mxu0 0.0
    %1284 = vmatpush1.msra.mxu0 %v1237
    %1285 = vmatprep.subr.mxu0 0.0
    %1286 = vmatpush1.msra.mxu0 %v1236
    %1287 = vmatprep.subr.mxu0 0.0
    %1288 = vmatpush1.msra.mxu0 %v1235
    %1289 = vmatprep.subr.mxu0 0.0
    %1290 = vmatpush1.msra.mxu0 %v1234
    %1291 = vmatprep.subr.mxu0 0.0
    %1292 = vmatpush1.msra.mxu0 %v1233
    %1293 = vmatprep.subr.mxu0 0.0
    %1294 = vmatpush1.msra.mxu0 %v1232
    %1295 = vmatprep.subr.mxu0 0.0
    %1296 = vmatpush1.msra.mxu0 %v1231
    %1297 = vmatprep.subr.mxu0 0.0
    %1298 = vmatpush1.msra.mxu0 %v1230
    %1299 = vmatprep.subr.mxu0 0.0
    %1300 = vmatpush2.msra.mxu0 0.0
    %1301 = vmatprep.subr.mxu0 0.0
    %1302 = vmatpush2.msra.mxu0 0.0
    %1303 = vmatprep.subr.mxu0 0.0
    %1304 = vmatpush2.msra.mxu0 0.0
    %1305 = vmatprep.subr.mxu0 0.0
    %1306 = vmatpush2.msra.mxu0 0.0
    %1307 = vmatprep.subr.mxu0 0.0
    %1308 = vmatpush2.msra.mxu0 0.0
    %1309 = vmatprep.subr.mxu0 0.0
    %1310 = vmatpush2.msra.mxu0 0.0
    %1311 = vmatprep.subr.mxu0 0.0
    %1312 = vmatpush2.msra.mxu0 0.0
    %1313 = vmatprep.subr.mxu0 0.0
    %1314 = vmatpush2.msra.mxu0 0.0
    %1315 = vmatprep.subr.mxu0 0.0
    %1316 = vmatpush2.msra.mxu0 0.0
    %1317 = vmatprep.subr.mxu0 0.0
    %1318 = vmatpush2.msra.mxu0 0.0
    %1319 = vmatprep.subr.mxu0 0.0
    %1320 = vmatpush2.msra.mxu0 0.0
    %1321 = vmatprep.subr.mxu0 0.0
    %1322 = vmatpush2.msra.mxu0 0.0
    %1323 = vmatprep.subr.mxu0 0.0
    %1324 = vmatpush2.msra.mxu0 %v1249
    %1325 = vmatprep.subr.mxu0 0.0
    %1326 = vmatpush2.msra.mxu0 %v1248
    %1327 = vmatprep.subr.mxu0 0.0
    %1328 = vmatpush2.msra.mxu0 %v1247
    %1329 = vmatprep.subr.mxu0 0.0
    %1330 = vmatpush2.msra.mxu0 %v1246
    %1331 = vmatprep.mubr.f32.mxu0 %v1256
    %1332 = vmatmul.mubr.f32.gmra.mxu0 %v1225
    %v1333 = vpop.f32.mrf.mxu0
    %v1334 = vadd.f32 %v1254, %v1333
    %v1335 = vpop.f32.mrf.mxu0
    %1336 = vmatprep.mubr.f32.mxu0 %v1259
    %1337 = vmatmul.mubr.f32.gmra.mxu0 %v1226
    %v1338 = vpop.f32.mrf.mxu0
    %v1339 = vadd.f32 %v1254, %v1338
    %v1340 = vpop.f32.mrf.mxu0
    %1341 = vmatprep.mubr.f32.mxu0 %v1262
    %1342 = vmatmul.mubr.f32.gmra.mxu0 %v1227
    %v1343 = vpop.f32.mrf.mxu0
    %v1344 = vadd.f32 %v1254, %v1343
    %v1345 = vpop.f32.mrf.mxu0
    %1346 = vmatprep.mubr.f32.mxu0 %v1265
    %1347 = vmatmul.mubr.f32.gmra.mxu0 %v1228
    %v1348 = vpop.f32.mrf.mxu0
    %v1349 = vadd.f32 %v1254, %v1348
    %v1350 = vpop.f32.mrf.mxu0
    %1351 = vdwg.mxu0
    %v1352 = vmax.f32 %v1334, 0.0
    %v1353 = vmax.f32 %v1339, 0.0
    %v1354 = vmax.f32 %v1344, 0.0
    %v1355 = vmax.f32 %v1349, 0.0
    %1356 = vmatprep.subr.mxu0 0.0
    %1357 = vmatpush1.msra.mxu0 0.0
    %1358 = vmatprep.subr.mxu0 0.0
    %1359 = vmatpush1.msra.mxu0 0.0
    %1360 = vmatprep.subr.mxu0 0.0
    %1361 = vmatpush1.msra.mxu0 0.0
    %1362 = vmatprep.subr.mxu0 0.0
    %1363 = vmatpush1.msra.mxu0 0.0
    %1364 = vmatprep.subr.mxu0 0.0
    %1365 = vmatpush1.msra.mxu0 0.0
    %1366 = vmatprep.subr.mxu0 0.0
    %1367 = vmatpush1.msra.mxu0 0.0
    %1368 = vmatprep.subr.mxu0 0.0
    %1369 = vmatpush1.msra.mxu0 0.0
    %1370 = vmatprep.subr.mxu0 0.0
    %1371 = vmatpush1.msra.mxu0 0.0
    %1372 = vmatprep.subr.mxu0 0.0
    %1373 = vmatpush1.msra.mxu0 0.0
    %1374 = vmatprep.subr.mxu0 0.0
    %1375 = vmatpush1.msra.mxu0 0.0
    %1376 = vmatprep.subr.mxu0 0.0
    %1377 = vmatpush1.msra.mxu0 0.0
    %1378 = vmatprep.subr.mxu0 0.0
    %1379 = vmatpush1.msra.mxu0 0.0
    %1380 = vmatprep.subr.mxu0 0.0
    %1381 = vmatpush1.msra.mxu0 %v1355
    %1382 = vmatprep.subr.mxu0 0.0
    %1383 = vmatpush1.msra.mxu0 %v1354
    %1384 = vmatprep.subr.mxu0 0.0
    %1385 = vmatpush1.msra.mxu0 %v1353
    %1386 = vmatprep.subr.mxu0 0.0
    %1387 = vmatpush1.msra.mxu0 %v1352
    %1388 = vmatprep.subr.mxu0 0.0
    %1389 = vmatpush2.msra.mxu0 0.0
    %1390 = vmatprep.subr.mxu0 0.0
    %1391 = vmatpush2.msra.mxu0 0.0
    %1392 = vmatprep.subr.mxu0 0.0
    %1393 = vmatpush2.msra.mxu0 0.0
    %1394 = vmatprep.subr.mxu0 0.0
    %1395 = vmatpush2.msra.mxu0 0.0
    %1396 = vmatprep.subr.mxu0 0.0
    %1397 = vmatpush2.msra.mxu0 0.0
    %1398 = vmatprep.subr.mxu0 0.0
    %1399 = vmatpush2.msra.mxu0 0.0
    %1400 = vmatprep.subr.mxu0 0.0
    %1401 = vmatpush2.msra.mxu0 0.0
    %1402 = vmatprep.subr.mxu0 0.0
    %1403 = vmatpush2.msra.mxu0 0.0
    %1404 = vmatprep.subr.mxu0 0.0
    %1405 = vmatpush2.msra.mxu0 0.0
    %1406 = vmatprep.subr.mxu0 0.0
    %1407 = vmatpush2.msra.mxu0 0.0
    %1408 = vmatprep.subr.mxu0 0.0
    %1409 = vmatpush2.msra.mxu0 0.0
    %1410 = vmatprep.subr.mxu0 0.0
    %1411 = vmatpush2.msra.mxu0 0.0
    %1412 = vmatprep.subr.mxu0 0.0
    %1413 = vmatpush2.msra.mxu0 0.0
    %1414 = vmatprep.subr.mxu0 0.0
    %1415 = vmatpush2.msra.mxu0 0.0
    %1416 = vmatprep.subr.mxu0 0.0
    %1417 = vmatpush2.msra.mxu0 0.0
    %1418 = vmatprep.subr.mxu0 0.0
    %1419 = vmatpush2.msra.mxu0 0.0
    %1420 = vmatprep.mubr.f32.mxu0 0.0
    %1421 = vmatmul.mubr.f32.gmra.mxu0 %v200
    %v1422 = vpop.f32.mrf.mxu0
    %v1423 = vadd.f32 0.0, %v1422
    %v1424 = vpop.f32.mrf.mxu0
    %1425 = vdwg.mxu0
    %v1426 = vmul.f32 %v1352, %v1352
    %v1427 = vmul.f32 %v1353, %v1353
    %v1428 = vmul.f32 %v1354, %v1354
    %v1429 = vmul.f32 %v1355, %v1355
    %1430 = vmatprep.subr.mxu0 0.0
    %1431 = vmatpush1.msra.mxu0 0.0
    %1432 = vmatprep.subr.mxu0 0.0
    %1433 = vmatpush1.msra.mxu0 0.0
    %1434 = vmatprep.subr.mxu0 0.0
    %1435 = vmatpush1.msra.mxu0 0.0
    %1436 = vmatprep.subr.mxu0 0.0
    %1437 = vmatpush1.msra.mxu0 0.0
    %1438 = vmatprep.subr.mxu0 0.0
    %1439 = vmatpush1.msra.mxu0 0.0
    %1440 = vmatprep.subr.mxu0 0.0
    %1441 = vmatpush1.msra.mxu0 0.0
    %1442 = vmatprep.subr.mxu0 0.0
    %1443 = vmatpush1.msra.mxu0 0.0
    %1444 = vmatprep.subr.mxu0 0.0
    %1445 = vmatpush1.msra.mxu0 0.0
    %1446 = vmatprep.subr.mxu0 0.0
    %1447 = vmatpush1.msra.mxu0 0.0
    %1448 = vmatprep.subr.mxu0 0.0
    %1449 = vmatpush1.msra.mxu0 0.0
    %1450 = vmatprep.subr.mxu0 0.0
    %1451 = vmatpush1.msra.mxu0 0.0
    %1452 = vmatprep.subr.mxu0 0.0
    %1453 = vmatpush1.msra.mxu0 0.0
    %1454 = vmatprep.subr.mxu0 0.0
    %1455 = vmatpush1.msra.mxu0 %v1429
    %1456 = vmatprep.subr.mxu0 0.0
    %1457 = vmatpush1.msra.mxu0 %v1428
    %1458 = vmatprep.subr.mxu0 0.0
    %1459 = vmatpush1.msra.mxu0 %v1427
    %1460 = vmatprep.subr.mxu0 0.0
    %1461 = vmatpush1.msra.mxu0 %v1426
    %1462 = vmatprep.subr.mxu0 0.0
    %1463 = vmatpush2.msra.mxu0 0.0
    %1464 = vmatprep.subr.mxu0 0.0
    %1465 = vmatpush2.msra.mxu0 0.0
    %1466 = vmatprep.subr.mxu0 0.0
    %1467 = vmatpush2.msra.mxu0 0.0
    %1468 = vmatprep.subr.mxu0 0.0
    %1469 = vmatpush2.msra.mxu0 0.0
    %1470 = vmatprep.subr.mxu0 0.0
    %1471 = vmatpush2.msra.mxu0 0.0
    %1472 = vmatprep.subr.mxu0 0.0
    %1473 = vmatpush2.msra.mxu0 0.0
    %1474 = vmatprep.subr.mxu0 0.0
    %1475 = vmatpush2.msra.mxu0 0.0
    %1476 = vmatprep.subr.mxu0 0.0
    %1477 = vmatpush2.msra.mxu0 0.0
    %1478 = vmatprep.subr.mxu0 0.0
    %1479 = vmatpush2.msra.mxu0 0.0
    %1480 = vmatprep.subr.mxu0 0.0
    %1481 = vmatpush2.msra.mxu0 0.0
    %1482 = vmatprep.subr.mxu0 0.0
    %1483 = vmatpush2.msra.mxu0 0.0
    %1484 = vmatprep.subr.mxu0 0.0
    %1485 = vmatpush2.msra.mxu0 0.0
    %1486 = vmatprep.subr.mxu0 0.0
    %1487 = vmatpush2.msra.mxu0 0.0
    %1488 = vmatprep.subr.mxu0 0.0
    %1489 = vmatpush2.msra.mxu0 0.0
    %1490 = vmatprep.subr.mxu0 0.0
    %1491 = vmatpush2.msra.mxu0 0.0
    %1492 = vmatprep.subr.mxu0 0.0
    %1493 = vmatpush2.msra.mxu0 0.0
    %1494 = vmatprep.mubr.f32.mxu0 0.0
    %1495 = vmatmul.mubr.f32.gmra.mxu0 %v200
    %v1496 = vpop.f32.mrf.mxu0
    %v1497 = vadd.f32 0.0, %v1496
    %v1498 = vpop.f32.mrf.mxu0
    %1499 = vdwg.mxu0
    %v1500 = vmul.f32 %v1423, 0.03125
    %v1501 = vmul.f32 %v1497, 0.03125
    %v1502 = vmul.f32 %v1500, %v1500
    %v1503 = vsub.f32 %v1501, %v1502
    %v1504 = vmax.f32 %v1503, 0.0
    %v1505 = vld [vmem:[#allocation10 + $0x3] sm:$0x1]
    %v1506 = vadd.f32 %v1504, 1e-05
    %v1507 = vrsqrt.pop %v1506
    %v1508 = vmul.f32 %v1505, %v1507
    %v1509 = vld [vmem:[#allocation12 + $0x3] sm:$0x1]
    %v1510 = vmul.f32 %v1500, %v1508
    %v1511 = vsub.f32 %v1509, %v1510
    %v1512 = vlaneseq
    %v1513 = vshrl.u32 %v1512, 7
    %v1514 = vsub.s32 0, %v1513
    %v1515 = vrot.slane %v1508, %v1514
    %v1516 = vmul.f32 %v1352, %v1515
    %v1517 = vmul.f32 %v1353, %v1515
    %v1518 = vmul.f32 %v1354, %v1515
    %v1519 = vmul.f32 %v1355, %v1515
    %v1520 = vlaneseq
    %v1521 = vshrl.u32 %v1520, 7
    %v1522 = vsub.s32 0, %v1521
    %v1523 = vrot.slane %v1511, %v1522
    %v1524 = vadd.f32 %v1516, %v1523
    %v1525 = vadd.f32 %v1517, %v1523
    %v1526 = vadd.f32 %v1518, %v1523
    %v1527 = vadd.f32 %v1519, %v1523
    %1528 = vst.msk [vmem:[#allocation2 + $0x2] sm:$0xff] %vm101, %v1524
    %1529 = vst.msk [vmem:[#allocation2 + $0xa] sm:$0xff] %vm101, %v1525
    %1530 = vst.msk [vmem:[#allocation2 + $0x1a] sm:$0xff] %vm101, %v1526
    %1531 = vst.msk [vmem:[#allocation2 + $0x22] sm:$0xff] %vm101, %v1527
    %v1532 = vld [vmem:[#allocation2] sm:$0xff]
    %v1533 = vld [vmem:[#allocation2 + $0x8] sm:$0xff]
    %v1534 = vld [vmem:[#allocation2 + $0x18] sm:$0xff]
    %v1535 = vld [vmem:[#allocation2 + $0x20] sm:$0xff]
    %v1536 = vld [vmem:[#allocation2 + $0x1] sm:$0xff]
    %v1537 = vld [vmem:[#allocation2 + $0x9] sm:$0xff]
    %v1538 = vld [vmem:[#allocation2 + $0x19] sm:$0xff]
    %v1539 = vld [vmem:[#allocation2 + $0x21] sm:$0xff]
    %v1540 = vld [vmem:[#allocation2 + $0x2] sm:$0xff]
    %v1541 = vld [vmem:[#allocation2 + $0xa] sm:$0xff]
    %v1542 = vld [vmem:[#allocation2 + $0x1a] sm:$0xff]
    %v1543 = vld [vmem:[#allocation2 + $0x22] sm:$0xff]
    %v1544 = vld [vmem:[#allocation2 + $0x3] sm:$0xff]
    %v1545 = vld [vmem:[#allocation2 + $0xb] sm:$0xff]
    %v1546 = vld [vmem:[#allocation2 + $0x1b] sm:$0xff]
    %v1547 = vld [vmem:[#allocation2 + $0x23] sm:$0xff]
    %v1548 = vld [vmem:[#allocation2 + $0x4] sm:$0xff]
    %v1549 = vld [vmem:[#allocation2 + $0xc] sm:$0xff]
    %v1550 = vld [vmem:[#allocation2 + $0x1c] sm:$0xff]
    %v1551 = vld [vmem:[#allocation2 + $0x24] sm:$0xff]
    %1556 = vrot.lane.b32.xlu0 %v1536, 32
    %v1557 = vpop.permute.xlu0 %1556
    %1558 = vrot.lane.b32.xlu0 %v1537, 32
    %v1559 = vpop.permute.xlu0 %1558
    %1560 = vrot.lane.b32.xlu0 %v1538, 32
    %v1561 = vpop.permute.xlu0 %1560
    %1562 = vrot.lane.b32.xlu0 %v1539, 32
    %v1563 = vpop.permute.xlu0 %1562
    %1572 = vrot.lane.b32.xlu0 %v1540, 64
    %v1573 = vpop.permute.xlu0 %1572
    %1574 = vrot.lane.b32.xlu0 %v1541, 64
    %v1575 = vpop.permute.xlu0 %1574
    %1576 = vrot.lane.b32.xlu0 %v1542, 64
    %v1577 = vpop.permute.xlu0 %1576
    %1578 = vrot.lane.b32.xlu0 %v1543, 64
    %v1579 = vpop.permute.xlu0 %1578
    %1588 = vrot.lane.b32.xlu0 %v1544, 96
    %v1589 = vpop.permute.xlu0 %1588
    %1590 = vrot.lane.b32.xlu0 %v1545, 96
    %v1591 = vpop.permute.xlu0 %1590
    %1592 = vrot.lane.b32.xlu0 %v1546, 96
    %v1593 = vpop.permute.xlu0 %1592
    %1594 = vrot.lane.b32.xlu0 %v1547, 96
    %v1595 = vpop.permute.xlu0 %1594
    %v1600 = vsel %vm101, %v1532, %v1557
    %v1601 = vsel %vm101, %v1533, %v1559
    %v1602 = vsel %vm101, %v1534, %v1561
    %v1603 = vsel %vm101, %v1535, %v1563
    %v1604 = vsel %vm450, %v1600, %v1573
    %v1605 = vsel %vm450, %v1601, %v1575
    %v1606 = vsel %vm450, %v1602, %v1577
    %v1607 = vsel %vm450, %v1603, %v1579
    %v1608 = vsel %vm455, %v1604, %v1589
    %v1609 = vsel %vm455, %v1605, %v1591
    %v1610 = vsel %vm455, %v1606, %v1593
    %v1611 = vsel %vm455, %v1607, %v1595
    %s1612 = scalar_lea.vmem [#allocation9], 480
    %v1613 = vld [vmem:[%s1612] sm:$0xff]
    %v1614 = vld [vmem:[%s1612 + $0x8] sm:$0xff]
    %v1615 = vld [vmem:[%s1612 + $0x10] sm:$0xff]
    %v1616 = vld [vmem:[%s1612 + $0x18] sm:$0xff]
    %v1617 = vld [vmem:[%s1612 + $0x20] sm:$0xff]
    %v1618 = vld [vmem:[%s1612 + $0x28] sm:$0xff]
    %v1619 = vld [vmem:[%s1612 + $0x30] sm:$0xff]
    %v1620 = vld [vmem:[%s1612 + $0x38] sm:$0xff]
    %v1621 = vld [vmem:[%s1612 + $0x40] sm:$0xff]
    %v1622 = vld [vmem:[%s1612 + $0x48] sm:$0xff]
    %v1623 = vld [vmem:[%s1612 + $0x50] sm:$0xff]
    %v1624 = vld [vmem:[%s1612 + $0x58] sm:$0xff]
    %v1625 = vld [vmem:[%s1612 + $0x60] sm:$0xff]
    %v1626 = vld [vmem:[%s1612 + $0x68] sm:$0xff]
    %v1627 = vld [vmem:[%s1612 + $0x70] sm:$0xff]
    %v1628 = vld [vmem:[%s1612 + $0x78] sm:$0xff]
    %v1629 = vld [vmem:[%s1612 + $0x80] sm:$0xff]
    %v1630 = vld [vmem:[%s1612 + $0x88] sm:$0xff]
    %v1631 = vld [vmem:[%s1612 + $0x90] sm:$0xff]
    %v1632 = vld [vmem:[%s1612 + $0x98] sm:$0xff]
    %v1633 = vld [vmem:[%s3 + $0x4] sm:$0x1]
    %v1634 = vlaneseq
    %v1635 = vshrl.u32 %v1634, 7
    %v1636 = vsub.s32 0, %v1635
    %v1637 = vrot.slane %v1633, %v1636
    %v1639 = vsel %vm101, %v1548, 0
    %v1642 = vsel %vm101, %v1549, 0
    %v1645 = vsel %vm101, %v1550, 0
    %v1648 = vsel %vm101, %v1551, 0
    %1650 = vmatprep.subr.mxu0 0.0
    %1651 = vmatpush1.msra.mxu0 %v1628
    %1652 = vmatprep.subr.mxu0 0.0
    %1653 = vmatpush1.msra.mxu0 %v1627
    %1654 = vmatprep.subr.mxu0 0.0
    %1655 = vmatpush1.msra.mxu0 %v1626
    %1656 = vmatprep.subr.mxu0 0.0
    %1657 = vmatpush1.msra.mxu0 %v1625
    %1658 = vmatprep.subr.mxu0 0.0
    %1659 = vmatpush1.msra.mxu0 %v1624
    %1660 = vmatprep.subr.mxu0 0.0
    %1661 = vmatpush1.msra.mxu0 %v1623
    %1662 = vmatprep.subr.mxu0 0.0
    %1663 = vmatpush1.msra.mxu0 %v1622
    %1664 = vmatprep.subr.mxu0 0.0
    %1665 = vmatpush1.msra.mxu0 %v1621
    %1666 = vmatprep.subr.mxu0 0.0
    %1667 = vmatpush1.msra.mxu0 %v1620
    %1668 = vmatprep.subr.mxu0 0.0
    %1669 = vmatpush1.msra.mxu0 %v1619
    %1670 = vmatprep.subr.mxu0 0.0
    %1671 = vmatpush1.msra.mxu0 %v1618
    %1672 = vmatprep.subr.mxu0 0.0
    %1673 = vmatpush1.msra.mxu0 %v1617
    %1674 = vmatprep.subr.mxu0 0.0
    %1675 = vmatpush1.msra.mxu0 %v1616
    %1676 = vmatprep.subr.mxu0 0.0
    %1677 = vmatpush1.msra.mxu0 %v1615
    %1678 = vmatprep.subr.mxu0 0.0
    %1679 = vmatpush1.msra.mxu0 %v1614
    %1680 = vmatprep.subr.mxu0 0.0
    %1681 = vmatpush1.msra.mxu0 %v1613
    %1682 = vmatprep.subr.mxu0 0.0
    %1683 = vmatpush2.msra.mxu0 0.0
    %1684 = vmatprep.subr.mxu0 0.0
    %1685 = vmatpush2.msra.mxu0 0.0
    %1686 = vmatprep.subr.mxu0 0.0
    %1687 = vmatpush2.msra.mxu0 0.0
    %1688 = vmatprep.subr.mxu0 0.0
    %1689 = vmatpush2.msra.mxu0 0.0
    %1690 = vmatprep.subr.mxu0 0.0
    %1691 = vmatpush2.msra.mxu0 0.0
    %1692 = vmatprep.subr.mxu0 0.0
    %1693 = vmatpush2.msra.mxu0 0.0
    %1694 = vmatprep.subr.mxu0 0.0
    %1695 = vmatpush2.msra.mxu0 0.0
    %1696 = vmatprep.subr.mxu0 0.0
    %1697 = vmatpush2.msra.mxu0 0.0
    %1698 = vmatprep.subr.mxu0 0.0
    %1699 = vmatpush2.msra.mxu0 0.0
    %1700 = vmatprep.subr.mxu0 0.0
    %1701 = vmatpush2.msra.mxu0 0.0
    %1702 = vmatprep.subr.mxu0 0.0
    %1703 = vmatpush2.msra.mxu0 0.0
    %1704 = vmatprep.subr.mxu0 0.0
    %1705 = vmatpush2.msra.mxu0 0.0
    %1706 = vmatprep.subr.mxu0 0.0
    %1707 = vmatpush2.msra.mxu0 %v1632
    %1708 = vmatprep.subr.mxu0 0.0
    %1709 = vmatpush2.msra.mxu0 %v1631
    %1710 = vmatprep.subr.mxu0 0.0
    %1711 = vmatpush2.msra.mxu0 %v1630
    %1712 = vmatprep.subr.mxu0 0.0
    %1713 = vmatpush2.msra.mxu0 %v1629
    %1714 = vmatprep.mubr.f32.mxu0 %v1639
    %1715 = vmatmul.mubr.f32.gmra.mxu0 %v1608
    %v1716 = vpop.f32.mrf.mxu0
    %v1717 = vadd.f32 %v1637, %v1716
    %v1718 = vpop.f32.mrf.mxu0
    %1719 = vmatprep.mubr.f32.mxu0 %v1642
    %1720 = vmatmul.mubr.f32.gmra.mxu0 %v1609
    %v1721 = vpop.f32.mrf.mxu0
    %v1722 = vadd.f32 %v1637, %v1721
    %v1723 = vpop.f32.mrf.mxu0
    %1724 = vmatprep.mubr.f32.mxu0 %v1645
    %1725 = vmatmul.mubr.f32.gmra.mxu0 %v1610
    %v1726 = vpop.f32.mrf.mxu0
    %v1727 = vadd.f32 %v1637, %v1726
    %v1728 = vpop.f32.mrf.mxu0
    %1729 = vmatprep.mubr.f32.mxu0 %v1648
    %1730 = vmatmul.mubr.f32.gmra.mxu0 %v1611
    %v1731 = vpop.f32.mrf.mxu0
    %v1732 = vadd.f32 %v1637, %v1731
    %v1733 = vpop.f32.mrf.mxu0
    %1734 = vdwg.mxu0
    %v1735 = vmax.f32 %v1717, 0.0
    %v1736 = vmax.f32 %v1722, 0.0
    %v1737 = vmax.f32 %v1727, 0.0
    %v1738 = vmax.f32 %v1732, 0.0
    %1739 = vmatprep.subr.mxu0 0.0
    %1740 = vmatpush1.msra.mxu0 0.0
    %1741 = vmatprep.subr.mxu0 0.0
    %1742 = vmatpush1.msra.mxu0 0.0
    %1743 = vmatprep.subr.mxu0 0.0
    %1744 = vmatpush1.msra.mxu0 0.0
    %1745 = vmatprep.subr.mxu0 0.0
    %1746 = vmatpush1.msra.mxu0 0.0
    %1747 = vmatprep.subr.mxu0 0.0
    %1748 = vmatpush1.msra.mxu0 0.0
    %1749 = vmatprep.subr.mxu0 0.0
    %1750 = vmatpush1.msra.mxu0 0.0
    %1751 = vmatprep.subr.mxu0 0.0
    %1752 = vmatpush1.msra.mxu0 0.0
    %1753 = vmatprep.subr.mxu0 0.0
    %1754 = vmatpush1.msra.mxu0 0.0
    %1755 = vmatprep.subr.mxu0 0.0
    %1756 = vmatpush1.msra.mxu0 0.0
    %1757 = vmatprep.subr.mxu0 0.0
    %1758 = vmatpush1.msra.mxu0 0.0
    %1759 = vmatprep.subr.mxu0 0.0
    %1760 = vmatpush1.msra.mxu0 0.0
    %1761 = vmatprep.subr.mxu0 0.0
    %1762 = vmatpush1.msra.mxu0 0.0
    %1763 = vmatprep.subr.mxu0 0.0
    %1764 = vmatpush1.msra.mxu0 %v1738
    %1765 = vmatprep.subr.mxu0 0.0
    %1766 = vmatpush1.msra.mxu0 %v1737
    %1767 = vmatprep.subr.mxu0 0.0
    %1768 = vmatpush1.msra.mxu0 %v1736
    %1769 = vmatprep.subr.mxu0 0.0
    %1770 = vmatpush1.msra.mxu0 %v1735
    %1771 = vmatprep.subr.mxu0 0.0
    %1772 = vmatpush2.msra.mxu0 0.0
    %1773 = vmatprep.subr.mxu0 0.0
    %1774 = vmatpush2.msra.mxu0 0.0
    %1775 = vmatprep.subr.mxu0 0.0
    %1776 = vmatpush2.msra.mxu0 0.0
    %1777 = vmatprep.subr.mxu0 0.0
    %1778 = vmatpush2.msra.mxu0 0.0
    %1779 = vmatprep.subr.mxu0 0.0
    %1780 = vmatpush2.msra.mxu0 0.0
    %1781 = vmatprep.subr.mxu0 0.0
    %1782 = vmatpush2.msra.mxu0 0.0
    %1783 = vmatprep.subr.mxu0 0.0
    %1784 = vmatpush2.msra.mxu0 0.0
    %1785 = vmatprep.subr.mxu0 0.0
    %1786 = vmatpush2.msra.mxu0 0.0
    %1787 = vmatprep.subr.mxu0 0.0
    %1788 = vmatpush2.msra.mxu0 0.0
    %1789 = vmatprep.subr.mxu0 0.0
    %1790 = vmatpush2.msra.mxu0 0.0
    %1791 = vmatprep.subr.mxu0 0.0
    %1792 = vmatpush2.msra.mxu0 0.0
    %1793 = vmatprep.subr.mxu0 0.0
    %1794 = vmatpush2.msra.mxu0 0.0
    %1795 = vmatprep.subr.mxu0 0.0
    %1796 = vmatpush2.msra.mxu0 0.0
    %1797 = vmatprep.subr.mxu0 0.0
    %1798 = vmatpush2.msra.mxu0 0.0
    %1799 = vmatprep.subr.mxu0 0.0
    %1800 = vmatpush2.msra.mxu0 0.0
    %1801 = vmatprep.subr.mxu0 0.0
    %1802 = vmatpush2.msra.mxu0 0.0
    %1803 = vmatprep.mubr.f32.mxu0 0.0
    %1804 = vmatmul.mubr.f32.gmra.mxu0 %v200
    %v1805 = vpop.f32.mrf.mxu0
    %v1806 = vadd.f32 0.0, %v1805
    %v1807 = vpop.f32.mrf.mxu0
    %1808 = vdwg.mxu0
    %v1809 = vmul.f32 %v1735, %v1735
    %v1810 = vmul.f32 %v1736, %v1736
    %v1811 = vmul.f32 %v1737, %v1737
    %v1812 = vmul.f32 %v1738, %v1738
    %1813 = vmatprep.subr.mxu0 0.0
    %1814 = vmatpush1.msra.mxu0 0.0
    %1815 = vmatprep.subr.mxu0 0.0
    %1816 = vmatpush1.msra.mxu0 0.0
    %1817 = vmatprep.subr.mxu0 0.0
    %1818 = vmatpush1.msra.mxu0 0.0
    %1819 = vmatprep.subr.mxu0 0.0
    %1820 = vmatpush1.msra.mxu0 0.0
    %1821 = vmatprep.subr.mxu0 0.0
    %1822 = vmatpush1.msra.mxu0 0.0
    %1823 = vmatprep.subr.mxu0 0.0
    %1824 = vmatpush1.msra.mxu0 0.0
    %1825 = vmatprep.subr.mxu0 0.0
    %1826 = vmatpush1.msra.mxu0 0.0
    %1827 = vmatprep.subr.mxu0 0.0
    %1828 = vmatpush1.msra.mxu0 0.0
    %1829 = vmatprep.subr.mxu0 0.0
    %1830 = vmatpush1.msra.mxu0 0.0
    %1831 = vmatprep.subr.mxu0 0.0
    %1832 = vmatpush1.msra.mxu0 0.0
    %1833 = vmatprep.subr.mxu0 0.0
    %1834 = vmatpush1.msra.mxu0 0.0
    %1835 = vmatprep.subr.mxu0 0.0
    %1836 = vmatpush1.msra.mxu0 0.0
    %1837 = vmatprep.subr.mxu0 0.0
    %1838 = vmatpush1.msra.mxu0 %v1812
    %1839 = vmatprep.subr.mxu0 0.0
    %1840 = vmatpush1.msra.mxu0 %v1811
    %1841 = vmatprep.subr.mxu0 0.0
    %1842 = vmatpush1.msra.mxu0 %v1810
    %1843 = vmatprep.subr.mxu0 0.0
    %1844 = vmatpush1.msra.mxu0 %v1809
    %1845 = vmatprep.subr.mxu0 0.0
    %1846 = vmatpush2.msra.mxu0 0.0
    %1847 = vmatprep.subr.mxu0 0.0
    %1848 = vmatpush2.msra.mxu0 0.0
    %1849 = vmatprep.subr.mxu0 0.0
    %1850 = vmatpush2.msra.mxu0 0.0
    %1851 = vmatprep.subr.mxu0 0.0
    %1852 = vmatpush2.msra.mxu0 0.0
    %1853 = vmatprep.subr.mxu0 0.0
    %1854 = vmatpush2.msra.mxu0 0.0
    %1855 = vmatprep.subr.mxu0 0.0
    %1856 = vmatpush2.msra.mxu0 0.0
    %1857 = vmatprep.subr.mxu0 0.0
    %1858 = vmatpush2.msra.mxu0 0.0
    %1859 = vmatprep.subr.mxu0 0.0
    %1860 = vmatpush2.msra.mxu0 0.0
    %1861 = vmatprep.subr.mxu0 0.0
    %1862 = vmatpush2.msra.mxu0 0.0
    %1863 = vmatprep.subr.mxu0 0.0
    %1864 = vmatpush2.msra.mxu0 0.0
    %1865 = vmatprep.subr.mxu0 0.0
    %1866 = vmatpush2.msra.mxu0 0.0
    %1867 = vmatprep.subr.mxu0 0.0
    %1868 = vmatpush2.msra.mxu0 0.0
    %1869 = vmatprep.subr.mxu0 0.0
    %1870 = vmatpush2.msra.mxu0 0.0
    %1871 = vmatprep.subr.mxu0 0.0
    %1872 = vmatpush2.msra.mxu0 0.0
    %1873 = vmatprep.subr.mxu0 0.0
    %1874 = vmatpush2.msra.mxu0 0.0
    %1875 = vmatprep.subr.mxu0 0.0
    %1876 = vmatpush2.msra.mxu0 0.0
    %1877 = vmatprep.mubr.f32.mxu0 0.0
    %1878 = vmatmul.mubr.f32.gmra.mxu0 %v200
    %v1879 = vpop.f32.mrf.mxu0
    %v1880 = vadd.f32 0.0, %v1879
    %v1881 = vpop.f32.mrf.mxu0
    %1882 = vdwg.mxu0
    %v1883 = vmul.f32 %v1806, 0.03125
    %v1884 = vmul.f32 %v1880, 0.03125
    %v1885 = vmul.f32 %v1883, %v1883
    %v1886 = vsub.f32 %v1884, %v1885
    %v1887 = vmax.f32 %v1886, 0.0
    %v1888 = vld [vmem:[#allocation10 + $0x4] sm:$0x1]
    %v1889 = vadd.f32 %v1887, 1e-05
    %v1890 = vrsqrt.pop %v1889
    %v1891 = vmul.f32 %v1888, %v1890
    %v1892 = vld [vmem:[#allocation12 + $0x4] sm:$0x1]
    %v1893 = vmul.f32 %v1883, %v1891
    %v1894 = vsub.f32 %v1892, %v1893
    %v1895 = vlaneseq
    %v1896 = vshrl.u32 %v1895, 7
    %v1897 = vsub.s32 0, %v1896
    %v1898 = vrot.slane %v1891, %v1897
    %v1899 = vmul.f32 %v1735, %v1898
    %v1900 = vmul.f32 %v1736, %v1898
    %v1901 = vmul.f32 %v1737, %v1898
    %v1902 = vmul.f32 %v1738, %v1898
    %v1903 = vlaneseq
    %v1904 = vshrl.u32 %v1903, 7
    %v1905 = vsub.s32 0, %v1904
    %v1906 = vrot.slane %v1894, %v1905
    %v1907 = vadd.f32 %v1899, %v1906
    %v1908 = vadd.f32 %v1900, %v1906
    %v1909 = vadd.f32 %v1901, %v1906
    %v1910 = vadd.f32 %v1902, %v1906
    %v1911 = vadd.f32 %v1907, %v1141
    %v1912 = vadd.f32 %v1908, %v1142
    %v1913 = vadd.f32 %v1909, %v1143
    %v1914 = vadd.f32 %v1910, %v1144
    %1915 = vst.msk [vmem:[#allocation3] sm:$0xff] %vm101, %v1911
    %1916 = vst.msk [vmem:[#allocation3 + $0x8] sm:$0xff] %vm101, %v1912
    %1917 = vst.msk [vmem:[#allocation3 + $0x10] sm:$0xff] %vm101, %v1913
    %1918 = vst.msk [vmem:[#allocation3 + $0x18] sm:$0xff] %vm101, %v1914
    %v1919 = vld [vmem:[#allocation3] ss:$2 sm:$0xff]
    %s1920 = scalar_lea.vmem [#allocation3], 16
    %v1921 = vld [vmem:[%s1920] ss:$2 sm:$0xff]
    %s1922 = scalar_lea.vmem [#allocation3], 1
    %v1923 = vld [vmem:[%s1922] ss:$2 sm:$0xff]
    %s1924 = scalar_lea.vmem [#allocation3], 17
    %v1925 = vld [vmem:[%s1924] ss:$2 sm:$0xff]
    %v1926 = vmax.f32 %v1919, %v1923
    %v1927 = vmax.f32 %v1921, %v1925
    %1928 = vst.msk [vmem:[#allocation13] sm:$0xff] %vm101, %v1926
    %1929 = vst.msk [vmem:[#allocation13 + $0x8] sm:$0xff] %vm101, %v1927
    // Predicated region
    $region46: #{residual_stack_forward.1} parent=1 // pred_check
      _
    $region47: #{residual_stack_forward.1} parent=1 // pred_check_branch
      %1931 = sbr.rel (0) target = $region49
    $region48: #{residual_stack_forward.1} parent=1 // pred_region
      %s1933 = ssub.s32 256, 256
      %1934 = vsyncadd [#allocation6], %s1933
      %s1935 = sshll.u32 [#allocation13], 4
      %s1936 = int_to_ptr.vmem [resolvable:$true] %s1935
      %1941 = dma.vmem_to_hbm [thread:$0]  %s1936, 256, %s6, [#allocation6], 128, 128, 8
    $region49: #{residual_stack_forward.1} parent=1 // pred_fallthru
      _
    // Predicated region
    $region50: #{residual_stack_forward.1} parent=1 // pred_check
      _
    $region51: #{residual_stack_forward.1} parent=1 // pred_check_branch
      %1943 = sbr.rel (0) target = $region53
    $region52: #{residual_stack_forward.1} parent=1 // pred_region
      %1944 = dma.done [#allocation6], 256
    $region53: #{residual_stack_forward.1} parent=1 // pred_fallthru
      _
    %1945 = vsyncpa [#allocation5], 1
    %1946 = vsyncpa [#allocation8], 1
    %1947 = vsyncpa [#allocation11], 1
    %1948 = vsyncpa [#allocation6], 1

</llo_original>
